<compile_context>
chip_gen: v6e
topology: v6e:2x2x1
jax: 0.10.0
libtpu: 0.0.40
codegen_flags: <defaults>
</compile_context>

<pallas_src>
import functools

import jax
import jax.numpy as jnp
import numpy as np
from jax.experimental import pallas as pl
from jax.experimental.pallas import tpu as pltpu


def _round_up(v, m):
    return ((v + m - 1) // m) * m


def _flowstep_kernel(x_ref, p_ref, z_ref, ld_ref, *, C, Ch, hidden, HW, N):
    """x_ref: (C, N*HW); p_ref: packed params (PR, PC); z_ref: (C, N*HW); ld_ref: (1, N)."""
    x = x_ref[...]                                     # (C, NHW) lane-dense slab

    # ---- fused ActNorm + invertible 1x1 conv: y2 = Wf @ x + bf ----
    wf = p_ref[0:C, 0:C]                               # (C, C): column ci = Wf[:, ci]
    bf = p_ref[0:C, C:C + 1]                           # (C, 1)
    y2 = bf + x[0:1, :] * wf[:, 0:1]
    for ci in range(1, C):                             # C=4: unrolled VPU broadcast-FMAs
        y2 = y2 + x[ci:ci + 1, :] * wf[:, ci:ci + 1]   # (C, NHW)

    xa = y2[0:Ch, :]                                   # (Ch, NHW)
    xb = y2[Ch:C, :]                                   # (Ch, NHW)

    # ---- coupling net layer 1 (per-pixel MLP): h = relu(W1^T xa + b1) ----
    c0 = C + 1
    w1t = p_ref[0:hidden, c0:c0 + Ch]                  # (hidden, Ch)
    b1 = p_ref[0:hidden, c0 + Ch:c0 + Ch + 1]          # (hidden, 1)
    h = b1 + xa[0:1, :] * w1t[:, 0:1]
    for ci in range(1, Ch):
        h = h + xa[ci:ci + 1, :] * w1t[:, ci:ci + 1]
    h = jnp.maximum(h, 0.0)                            # (hidden, NHW), sublane-dense

    # ---- layer 2: st = W2^T h + b2  -> (log_s, t) ----
    c1 = c0 + Ch + 1
    w2t = p_ref[0:C, c1:c1 + hidden]                   # (C, hidden)
    b2 = p_ref[0:C, c1 + hidden:c1 + hidden + 1]       # (C, 1)
    st = b2 + h[0:1, :] * w2t[:, 0:1]
    for j in range(1, hidden):                         # hidden=32: bounded vreg pressure
        st = st + h[j:j + 1, :] * w2t[:, j:j + 1]      # (C, NHW)

    log_s = st[0:Ch, :]
    t = st[Ch:C, :]
    xb_new = xb * jnp.exp(log_s) + t

    # ---- lane-dense stores of both halves directly (no concatenate) ----
    z_ref[0:Ch, :] = xa.astype(z_ref.dtype)
    z_ref[Ch:C, :] = xb_new.astype(z_ref.dtype)

    # ---- per-sample coupling log-det: sum log_s over the (Ch, HW) segment of sample n ----
    parts = []
    for n in range(N):
        seg = log_s[:, n * HW:(n + 1) * HW]            # (Ch, HW), HW-aligned lane slice
        s_lane = jnp.sum(seg, axis=1, keepdims=True)   # (Ch, 1)   lane reduce
        parts.append(jnp.sum(s_lane, axis=0, keepdims=True))      # (1, 1) sublane reduce
    ld_ref[...] = jnp.concatenate(parts, axis=1)       # (1, N)


def flow_step_forward(x_nchw, log_det, params):
    """x_nchw: (N, C, H, W) float32; log_det: (N,) float32."""
    log_scale, bias, W, W1, b1, W2, b2 = params
    N, C, H, Wd = x_nchw.shape
    HW = H * Wd
    NHW = N * HW
    Ch = C // 2
    hidden = W1.shape[1]
    assert C % 2 == 0, "coupling split needs an even channel count"
    assert HW % 128 == 0, "lane-dense layout assumes H*W to be a multiple of 128"

    # Channels-first fused-batch slab: (C, N*HW). One tiny XLA transpose in, one out.
    x2 = jnp.transpose(x_nchw, (1, 0, 2, 3)).reshape(C, NHW)

    # Fold ActNorm into the 1x1 conv (exact): W @ (x*exp(ls) + b) = (W*exp(ls)) @ x + W @ b
    s = jnp.exp(log_scale).reshape(C)
    b = bias.reshape(C)
    Wf = W * s[None, :]
    bf = W @ b

    # Pack every small parameter into ONE tile-aligned VMEM block (column vectors side by side)
    # -> 2 input DMAs total (x + params), no per-array padding blow-up.
    ncols = C + 1 + Ch + 1 + hidden + 1
    PR = _round_up(max(C, hidden, 8), 8)
    PC = _round_up(max(ncols, 128), 128)
    P = jnp.zeros((PR, PC), jnp.float32)
    P = P.at[0:C, 0:C].set(Wf)                         # cols [0, C): Wf columns
    P = P.at[0:C, C].set(bf)                           # col  C     : fused bias
    c0 = C + 1
    P = P.at[0:hidden, c0:c0 + Ch].set(W1.T)           # cols [c0, c0+Ch): W1^T columns
    P = P.at[0:hidden, c0 + Ch].set(b1.reshape(hidden))
    c1 = c0 + Ch + 1
    P = P.at[0:C, c1:c1 + hidden].set(W2.T)            # cols [c1, c1+hidden): W2^T columns
    P = P.at[0:C, c1 + hidden].set(b2.reshape(C))

    kernel = functools.partial(_flowstep_kernel, C=C, Ch=Ch, hidden=hidden, HW=HW, N=N)

    # Single grid step: the kernel is fixed-overhead bound at this size, so no batch grid.
    # VMEM footprint ~ x + z + params ~ 3*(C*NHW*4B) + 16 KiB << the default scoped limit,
    # so no vmem_limit_bytes override is needed at these shapes.
    z_flat, ld_coupling = pl.pallas_call(
        kernel,
        out_shape=(
            jax.ShapeDtypeStruct((C, NHW), jnp.float32),
            jax.ShapeDtypeStruct((1, N), jnp.float32),
        ),
        grid=(1,),
        in_specs=[
            pl.BlockSpec((C, NHW), lambda i: (0, 0)),
            pl.BlockSpec((PR, PC), lambda i: (0, 0)),
        ],
        out_specs=(
            pl.BlockSpec((C, NHW), lambda i: (0, 0)),
            pl.BlockSpec((1, N), lambda i: (0, 0)),
        ),
        compiler_params=pltpu.CompilerParams(dimension_semantics=("arbitrary",)),
    )(x2, P)

    # Scalar (sample-independent) log-det terms computed once in the wrapper.
    ld_actnorm = HW * jnp.sum(log_scale)
    ld_conv = HW * jnp.linalg.slogdet(W)[1]
    log_det_out = log_det + ld_actnorm + ld_conv + ld_coupling[0, :]

    z_nchw = jnp.transpose(z_flat.reshape(C, N, H, Wd), (1, 0, 2, 3))
    return z_nchw, log_det_out


def flow_step_reference(x_nchw, log_det, params):
    """Pure-JAX reference for correctness checking."""
    log_scale, bias, W, W1, b1, W2, b2 = params
    N, C, H, Wd = x_nchw.shape
    HW = H * Wd
    Ch = C // 2
    x = jnp.transpose(x_nchw, (0, 2, 3, 1)).reshape(N, HW, C)
    y = x * jnp.exp(log_scale) + bias
    y2 = y @ W.T
    xa, xb = y2[..., :Ch], y2[..., Ch:]
    h = jax.nn.relu(xa @ W1 + b1)
    st = h @ W2 + b2
    log_s, t = st[..., :Ch], st[..., Ch:]
    xbn = xb * jnp.exp(log_s) + t
    z = jnp.concatenate([xa, xbn], axis=-1)
    ld = (log_det + HW * jnp.sum(log_scale) + HW * jnp.linalg.slogdet(W)[1]
          + jnp.sum(log_s, axis=(1, 2)))
    z_nchw = jnp.transpose(z.reshape(N, H, Wd, C), (0, 3, 1, 2))
    return z_nchw, ld


if __name__ == "__main__":
    N, C, H, Wd = 2, 4, 16, 16
    hidden = 32          # "affine_params": hidden width of the coupling network
    Ch = C // 2

    key = jax.random.PRNGKey(0)
    ks = jax.random.split(key, 8)

    # Deterministic parameter init (synthetic, not a checkpoint).
    log_scale = 0.1 * jax.random.normal(ks[0], (1, C), jnp.float32)
    bias = 0.1 * jax.random.normal(ks[1], (1, C), jnp.float32)
    W, _ = jnp.linalg.qr(jax.random.normal(ks[2], (C, C), jnp.float32))   # invertible 1x1-conv weight
    W1 = 0.1 * jax.random.normal(ks[3], (Ch, hidden), jnp.float32)
    b1 = jnp.zeros((1, hidden), jnp.float32)
    W2 = 0.05 * jax.random.normal(ks[4], (hidden, C), jnp.float32)
    b2 = jnp.zeros((1, C), jnp.float32)
    params = (log_scale, bias, W, W1, b1, W2, b2)

    x = jax.random.normal(ks[5], (N, C, H, Wd), jnp.float32)
    log_det0 = jnp.zeros((N,), jnp.float32)

    z, log_det = flow_step_forward(x, log_det0, params)
    jax.block_until_ready((z, log_det))

    z_ref, ld_ref = flow_step_reference(x, log_det0, params)
    np.testing.assert_allclose(np.asarray(z), np.asarray(z_ref), atol=1e-4, rtol=1e-4)
    np.testing.assert_allclose(np.asarray(log_det), np.asarray(ld_ref), atol=1e-4, rtol=1e-4)

    print("KERNEL_OK")
</pallas_src>

<mosaic_0001>
module attributes {stable_mosaic.version = 11 : i64} {
  func.func @_flowstep_kernel(%arg0: i32, %arg1: memref<4x512xf32, #tpu.memory_space<vmem>>, %arg2: memref<32x128xf32, #tpu.memory_space<vmem>>, %arg3: memref<4x512xf32, #tpu.memory_space<vmem>>, %arg4: memref<1x2xf32, #tpu.memory_space<vmem>>) attributes {dimension_semantics = [#tpu.dimension_semantics<arbitrary>], iteration_bounds = array<i64: 1>, scalar_prefetch = 0 : i64, scratch_operands = 0 : i64, tpu.core_type = #tpu.core_type<tc>, window_params = [{pipeline_mode = #tpu.pipeline_mode<synchronous>, transform_indices = @transform_0, window_bounds = array<i64: 4, 512>}, {pipeline_mode = #tpu.pipeline_mode<synchronous>, transform_indices = @transform_1, window_bounds = array<i64: 32, 128>}, {pipeline_mode = #tpu.pipeline_mode<synchronous>, transform_indices = @transform_2, window_bounds = array<i64: 4, 512>}, {pipeline_mode = #tpu.pipeline_mode<synchronous>, transform_indices = @transform_3, window_bounds = array<i64: 1, 2>}]} {
    %c0 = arith.constant 0 : index
    %c0_0 = arith.constant 0 : index
    %0 = vector.load %arg1[%c0, %c0_0] : memref<4x512xf32, #tpu.memory_space<vmem>>, vector<4x512xf32>
    %c0_1 = arith.constant 0 : index
    %c0_2 = arith.constant 0 : index
    %1 = vector.load %arg2[%c0_1, %c0_2] : memref<32x128xf32, #tpu.memory_space<vmem>>, vector<4x4xf32>
    %c0_3 = arith.constant 0 : index
    %c4 = arith.constant 4 : index
    %2 = vector.load %arg2[%c0_3, %c4] : memref<32x128xf32, #tpu.memory_space<vmem>>, vector<4x1xf32>
    %3 = vector.extract_strided_slice %0 {offsets = [0, 0], sizes = [1, 512], strides = [1, 1]} : vector<4x512xf32> to vector<1x512xf32>
    %4 = vector.extract_strided_slice %1 {offsets = [0, 0], sizes = [4, 1], strides = [1, 1]} : vector<4x4xf32> to vector<4x1xf32>
    %5 = vector.broadcast %3 : vector<1x512xf32> to vector<4x512xf32>
    %6 = vector.broadcast %4 : vector<4x1xf32> to vector<4x512xf32>
    %7 = arith.mulf %5, %6 : vector<4x512xf32>
    %8 = vector.broadcast %2 : vector<4x1xf32> to vector<4x512xf32>
    %9 = arith.addf %8, %7 : vector<4x512xf32>
    %10 = vector.extract_strided_slice %0 {offsets = [1, 0], sizes = [1, 512], strides = [1, 1]} : vector<4x512xf32> to vector<1x512xf32>
    %11 = vector.extract_strided_slice %1 {offsets = [0, 1], sizes = [4, 1], strides = [1, 1]} : vector<4x4xf32> to vector<4x1xf32>
    %12 = vector.broadcast %10 : vector<1x512xf32> to vector<4x512xf32>
    %13 = vector.broadcast %11 : vector<4x1xf32> to vector<4x512xf32>
    %14 = arith.mulf %12, %13 : vector<4x512xf32>
    %15 = arith.addf %9, %14 : vector<4x512xf32>
    %16 = vector.extract_strided_slice %0 {offsets = [2, 0], sizes = [1, 512], strides = [1, 1]} : vector<4x512xf32> to vector<1x512xf32>
    %17 = vector.extract_strided_slice %1 {offsets = [0, 2], sizes = [4, 1], strides = [1, 1]} : vector<4x4xf32> to vector<4x1xf32>
    %18 = vector.broadcast %16 : vector<1x512xf32> to vector<4x512xf32>
    %19 = vector.broadcast %17 : vector<4x1xf32> to vector<4x512xf32>
    %20 = arith.mulf %18, %19 : vector<4x512xf32>
    %21 = arith.addf %15, %20 : vector<4x512xf32>
    %22 = vector.extract_strided_slice %0 {offsets = [3, 0], sizes = [1, 512], strides = [1, 1]} : vector<4x512xf32> to vector<1x512xf32>
    %23 = vector.extract_strided_slice %1 {offsets = [0, 3], sizes = [4, 1], strides = [1, 1]} : vector<4x4xf32> to vector<4x1xf32>
    %24 = vector.broadcast %22 : vector<1x512xf32> to vector<4x512xf32>
    %25 = vector.broadcast %23 : vector<4x1xf32> to vector<4x512xf32>
    %26 = arith.mulf %24, %25 : vector<4x512xf32>
    %27 = arith.addf %21, %26 : vector<4x512xf32>
    %28 = vector.extract_strided_slice %27 {offsets = [0, 0], sizes = [2, 512], strides = [1, 1]} : vector<4x512xf32> to vector<2x512xf32>
    %29 = vector.extract_strided_slice %27 {offsets = [2, 0], sizes = [2, 512], strides = [1, 1]} : vector<4x512xf32> to vector<2x512xf32>
    %c0_4 = arith.constant 0 : index
    %c5 = arith.constant 5 : index
    %30 = vector.load %arg2[%c0_4, %c5] : memref<32x128xf32, #tpu.memory_space<vmem>>, vector<32x2xf32>
    %c0_5 = arith.constant 0 : index
    %c7 = arith.constant 7 : index
    %31 = vector.load %arg2[%c0_5, %c7] : memref<32x128xf32, #tpu.memory_space<vmem>>, vector<32x1xf32>
    %32 = vector.extract_strided_slice %28 {offsets = [0, 0], sizes = [1, 512], strides = [1, 1]} : vector<2x512xf32> to vector<1x512xf32>
    %33 = vector.extract_strided_slice %30 {offsets = [0, 0], sizes = [32, 1], strides = [1, 1]} : vector<32x2xf32> to vector<32x1xf32>
    %34 = vector.broadcast %32 : vector<1x512xf32> to vector<32x512xf32>
    %35 = vector.broadcast %33 : vector<32x1xf32> to vector<32x512xf32>
    %36 = arith.mulf %34, %35 : vector<32x512xf32>
    %37 = vector.broadcast %31 : vector<32x1xf32> to vector<32x512xf32>
    %38 = arith.addf %37, %36 : vector<32x512xf32>
    %39 = vector.extract_strided_slice %28 {offsets = [1, 0], sizes = [1, 512], strides = [1, 1]} : vector<2x512xf32> to vector<1x512xf32>
    %40 = vector.extract_strided_slice %30 {offsets = [0, 1], sizes = [32, 1], strides = [1, 1]} : vector<32x2xf32> to vector<32x1xf32>
    %41 = vector.broadcast %39 : vector<1x512xf32> to vector<32x512xf32>
    %42 = vector.broadcast %40 : vector<32x1xf32> to vector<32x512xf32>
    %43 = arith.mulf %41, %42 : vector<32x512xf32>
    %44 = arith.addf %38, %43 : vector<32x512xf32>
    %cst = arith.constant 0.000000e+00 : f32
    %45 = vector.broadcast %cst : f32 to vector<32x512xf32>
    %46 = arith.maximumf %44, %45 : vector<32x512xf32>
    %c0_6 = arith.constant 0 : index
    %c8 = arith.constant 8 : index
    %47 = vector.load %arg2[%c0_6, %c8] : memref<32x128xf32, #tpu.memory_space<vmem>>, vector<4x32xf32>
    %c0_7 = arith.constant 0 : index
    %c40 = arith.constant 40 : index
    %48 = vector.load %arg2[%c0_7, %c40] : memref<32x128xf32, #tpu.memory_space<vmem>>, vector<4x1xf32>
    %49 = vector.extract_strided_slice %46 {offsets = [0, 0], sizes = [1, 512], strides = [1, 1]} : vector<32x512xf32> to vector<1x512xf32>
    %50 = vector.extract_strided_slice %47 {offsets = [0, 0], sizes = [4, 1], strides = [1, 1]} : vector<4x32xf32> to vector<4x1xf32>
    %51 = vector.broadcast %49 : vector<1x512xf32> to vector<4x512xf32>
    %52 = vector.broadcast %50 : vector<4x1xf32> to vector<4x512xf32>
    %53 = arith.mulf %51, %52 : vector<4x512xf32>
    %54 = vector.broadcast %48 : vector<4x1xf32> to vector<4x512xf32>
    %55 = arith.addf %54, %53 : vector<4x512xf32>
    %56 = vector.extract_strided_slice %46 {offsets = [1, 0], sizes = [1, 512], strides = [1, 1]} : vector<32x512xf32> to vector<1x512xf32>
    %57 = vector.extract_strided_slice %47 {offsets = [0, 1], sizes = [4, 1], strides = [1, 1]} : vector<4x32xf32> to vector<4x1xf32>
    %58 = vector.broadcast %56 : vector<1x512xf32> to vector<4x512xf32>
    %59 = vector.broadcast %57 : vector<4x1xf32> to vector<4x512xf32>
    %60 = arith.mulf %58, %59 : vector<4x512xf32>
    %61 = arith.addf %55, %60 : vector<4x512xf32>
    %62 = vector.extract_strided_slice %46 {offsets = [2, 0], sizes = [1, 512], strides = [1, 1]} : vector<32x512xf32> to vector<1x512xf32>
    %63 = vector.extract_strided_slice %47 {offsets = [0, 2], sizes = [4, 1], strides = [1, 1]} : vector<4x32xf32> to vector<4x1xf32>
    %64 = vector.broadcast %62 : vector<1x512xf32> to vector<4x512xf32>
    %65 = vector.broadcast %63 : vector<4x1xf32> to vector<4x512xf32>
    %66 = arith.mulf %64, %65 : vector<4x512xf32>
    %67 = arith.addf %61, %66 : vector<4x512xf32>
    %68 = vector.extract_strided_slice %46 {offsets = [3, 0], sizes = [1, 512], strides = [1, 1]} : vector<32x512xf32> to vector<1x512xf32>
    %69 = vector.extract_strided_slice %47 {offsets = [0, 3], sizes = [4, 1], strides = [1, 1]} : vector<4x32xf32> to vector<4x1xf32>
    %70 = vector.broadcast %68 : vector<1x512xf32> to vector<4x512xf32>
    %71 = vector.broadcast %69 : vector<4x1xf32> to vector<4x512xf32>
    %72 = arith.mulf %70, %71 : vector<4x512xf32>
    %73 = arith.addf %67, %72 : vector<4x512xf32>
    %74 = vector.extract_strided_slice %46 {offsets = [4, 0], sizes = [1, 512], strides = [1, 1]} : vector<32x512xf32> to vector<1x512xf32>
    %75 = vector.extract_strided_slice %47 {offsets = [0, 4], sizes = [4, 1], strides = [1, 1]} : vector<4x32xf32> to vector<4x1xf32>
    %76 = vector.broadcast %74 : vector<1x512xf32> to vector<4x512xf32>
    %77 = vector.broadcast %75 : vector<4x1xf32> to vector<4x512xf32>
    %78 = arith.mulf %76, %77 : vector<4x512xf32>
    %79 = arith.addf %73, %78 : vector<4x512xf32>
    %80 = vector.extract_strided_slice %46 {offsets = [5, 0], sizes = [1, 512], strides = [1, 1]} : vector<32x512xf32> to vector<1x512xf32>
    %81 = vector.extract_strided_slice %47 {offsets = [0, 5], sizes = [4, 1], strides = [1, 1]} : vector<4x32xf32> to vector<4x1xf32>
    %82 = vector.broadcast %80 : vector<1x512xf32> to vector<4x512xf32>
    %83 = vector.broadcast %81 : vector<4x1xf32> to vector<4x512xf32>
    %84 = arith.mulf %82, %83 : vector<4x512xf32>
    %85 = arith.addf %79, %84 : vector<4x512xf32>
    %86 = vector.extract_strided_slice %46 {offsets = [6, 0], sizes = [1, 512], strides = [1, 1]} : vector<32x512xf32> to vector<1x512xf32>
    %87 = vector.extract_strided_slice %47 {offsets = [0, 6], sizes = [4, 1], strides = [1, 1]} : vector<4x32xf32> to vector<4x1xf32>
    %88 = vector.broadcast %86 : vector<1x512xf32> to vector<4x512xf32>
    %89 = vector.broadcast %87 : vector<4x1xf32> to vector<4x512xf32>
    %90 = arith.mulf %88, %89 : vector<4x512xf32>
    %91 = arith.addf %85, %90 : vector<4x512xf32>
    %92 = vector.extract_strided_slice %46 {offsets = [7, 0], sizes = [1, 512], strides = [1, 1]} : vector<32x512xf32> to vector<1x512xf32>
    %93 = vector.extract_strided_slice %47 {offsets = [0, 7], sizes = [4, 1], strides = [1, 1]} : vector<4x32xf32> to vector<4x1xf32>
    %94 = vector.broadcast %92 : vector<1x512xf32> to vector<4x512xf32>
    %95 = vector.broadcast %93 : vector<4x1xf32> to vector<4x512xf32>
    %96 = arith.mulf %94, %95 : vector<4x512xf32>
    %97 = arith.addf %91, %96 : vector<4x512xf32>
    %98 = vector.extract_strided_slice %46 {offsets = [8, 0], sizes = [1, 512], strides = [1, 1]} : vector<32x512xf32> to vector<1x512xf32>
    %99 = vector.extract_strided_slice %47 {offsets = [0, 8], sizes = [4, 1], strides = [1, 1]} : vector<4x32xf32> to vector<4x1xf32>
    %100 = vector.broadcast %98 : vector<1x512xf32> to vector<4x512xf32>
    %101 = vector.broadcast %99 : vector<4x1xf32> to vector<4x512xf32>
    %102 = arith.mulf %100, %101 : vector<4x512xf32>
    %103 = arith.addf %97, %102 : vector<4x512xf32>
    %104 = vector.extract_strided_slice %46 {offsets = [9, 0], sizes = [1, 512], strides = [1, 1]} : vector<32x512xf32> to vector<1x512xf32>
    %105 = vector.extract_strided_slice %47 {offsets = [0, 9], sizes = [4, 1], strides = [1, 1]} : vector<4x32xf32> to vector<4x1xf32>
    %106 = vector.broadcast %104 : vector<1x512xf32> to vector<4x512xf32>
    %107 = vector.broadcast %105 : vector<4x1xf32> to vector<4x512xf32>
    %108 = arith.mulf %106, %107 : vector<4x512xf32>
    %109 = arith.addf %103, %108 : vector<4x512xf32>
    %110 = vector.extract_strided_slice %46 {offsets = [10, 0], sizes = [1, 512], strides = [1, 1]} : vector<32x512xf32> to vector<1x512xf32>
    %111 = vector.extract_strided_slice %47 {offsets = [0, 10], sizes = [4, 1], strides = [1, 1]} : vector<4x32xf32> to vector<4x1xf32>
    %112 = vector.broadcast %110 : vector<1x512xf32> to vector<4x512xf32>
    %113 = vector.broadcast %111 : vector<4x1xf32> to vector<4x512xf32>
    %114 = arith.mulf %112, %113 : vector<4x512xf32>
    %115 = arith.addf %109, %114 : vector<4x512xf32>
    %116 = vector.extract_strided_slice %46 {offsets = [11, 0], sizes = [1, 512], strides = [1, 1]} : vector<32x512xf32> to vector<1x512xf32>
    %117 = vector.extract_strided_slice %47 {offsets = [0, 11], sizes = [4, 1], strides = [1, 1]} : vector<4x32xf32> to vector<4x1xf32>
    %118 = vector.broadcast %116 : vector<1x512xf32> to vector<4x512xf32>
    %119 = vector.broadcast %117 : vector<4x1xf32> to vector<4x512xf32>
    %120 = arith.mulf %118, %119 : vector<4x512xf32>
    %121 = arith.addf %115, %120 : vector<4x512xf32>
    %122 = vector.extract_strided_slice %46 {offsets = [12, 0], sizes = [1, 512], strides = [1, 1]} : vector<32x512xf32> to vector<1x512xf32>
    %123 = vector.extract_strided_slice %47 {offsets = [0, 12], sizes = [4, 1], strides = [1, 1]} : vector<4x32xf32> to vector<4x1xf32>
    %124 = vector.broadcast %122 : vector<1x512xf32> to vector<4x512xf32>
    %125 = vector.broadcast %123 : vector<4x1xf32> to vector<4x512xf32>
    %126 = arith.mulf %124, %125 : vector<4x512xf32>
    %127 = arith.addf %121, %126 : vector<4x512xf32>
    %128 = vector.extract_strided_slice %46 {offsets = [13, 0], sizes = [1, 512], strides = [1, 1]} : vector<32x512xf32> to vector<1x512xf32>
    %129 = vector.extract_strided_slice %47 {offsets = [0, 13], sizes = [4, 1], strides = [1, 1]} : vector<4x32xf32> to vector<4x1xf32>
    %130 = vector.broadcast %128 : vector<1x512xf32> to vector<4x512xf32>
    %131 = vector.broadcast %129 : vector<4x1xf32> to vector<4x512xf32>
    %132 = arith.mulf %130, %131 : vector<4x512xf32>
    %133 = arith.addf %127, %132 : vector<4x512xf32>
    %134 = vector.extract_strided_slice %46 {offsets = [14, 0], sizes = [1, 512], strides = [1, 1]} : vector<32x512xf32> to vector<1x512xf32>
    %135 = vector.extract_strided_slice %47 {offsets = [0, 14], sizes = [4, 1], strides = [1, 1]} : vector<4x32xf32> to vector<4x1xf32>
    %136 = vector.broadcast %134 : vector<1x512xf32> to vector<4x512xf32>
    %137 = vector.broadcast %135 : vector<4x1xf32> to vector<4x512xf32>
    %138 = arith.mulf %136, %137 : vector<4x512xf32>
    %139 = arith.addf %133, %138 : vector<4x512xf32>
    %140 = vector.extract_strided_slice %46 {offsets = [15, 0], sizes = [1, 512], strides = [1, 1]} : vector<32x512xf32> to vector<1x512xf32>
    %141 = vector.extract_strided_slice %47 {offsets = [0, 15], sizes = [4, 1], strides = [1, 1]} : vector<4x32xf32> to vector<4x1xf32>
    %142 = vector.broadcast %140 : vector<1x512xf32> to vector<4x512xf32>
    %143 = vector.broadcast %141 : vector<4x1xf32> to vector<4x512xf32>
    %144 = arith.mulf %142, %143 : vector<4x512xf32>
    %145 = arith.addf %139, %144 : vector<4x512xf32>
    %146 = vector.extract_strided_slice %46 {offsets = [16, 0], sizes = [1, 512], strides = [1, 1]} : vector<32x512xf32> to vector<1x512xf32>
    %147 = vector.extract_strided_slice %47 {offsets = [0, 16], sizes = [4, 1], strides = [1, 1]} : vector<4x32xf32> to vector<4x1xf32>
    %148 = vector.broadcast %146 : vector<1x512xf32> to vector<4x512xf32>
    %149 = vector.broadcast %147 : vector<4x1xf32> to vector<4x512xf32>
    %150 = arith.mulf %148, %149 : vector<4x512xf32>
    %151 = arith.addf %145, %150 : vector<4x512xf32>
    %152 = vector.extract_strided_slice %46 {offsets = [17, 0], sizes = [1, 512], strides = [1, 1]} : vector<32x512xf32> to vector<1x512xf32>
    %153 = vector.extract_strided_slice %47 {offsets = [0, 17], sizes = [4, 1], strides = [1, 1]} : vector<4x32xf32> to vector<4x1xf32>
    %154 = vector.broadcast %152 : vector<1x512xf32> to vector<4x512xf32>
    %155 = vector.broadcast %153 : vector<4x1xf32> to vector<4x512xf32>
    %156 = arith.mulf %154, %155 : vector<4x512xf32>
    %157 = arith.addf %151, %156 : vector<4x512xf32>
    %158 = vector.extract_strided_slice %46 {offsets = [18, 0], sizes = [1, 512], strides = [1, 1]} : vector<32x512xf32> to vector<1x512xf32>
    %159 = vector.extract_strided_slice %47 {offsets = [0, 18], sizes = [4, 1], strides = [1, 1]} : vector<4x32xf32> to vector<4x1xf32>
    %160 = vector.broadcast %158 : vector<1x512xf32> to vector<4x512xf32>
    %161 = vector.broadcast %159 : vector<4x1xf32> to vector<4x512xf32>
    %162 = arith.mulf %160, %161 : vector<4x512xf32>
    %163 = arith.addf %157, %162 : vector<4x512xf32>
    %164 = vector.extract_strided_slice %46 {offsets = [19, 0], sizes = [1, 512], strides = [1, 1]} : vector<32x512xf32> to vector<1x512xf32>
    %165 = vector.extract_strided_slice %47 {offsets = [0, 19], sizes = [4, 1], strides = [1, 1]} : vector<4x32xf32> to vector<4x1xf32>
    %166 = vector.broadcast %164 : vector<1x512xf32> to vector<4x512xf32>
    %167 = vector.broadcast %165 : vector<4x1xf32> to vector<4x512xf32>
    %168 = arith.mulf %166, %167 : vector<4x512xf32>
    %169 = arith.addf %163, %168 : vector<4x512xf32>
    %170 = vector.extract_strided_slice %46 {offsets = [20, 0], sizes = [1, 512], strides = [1, 1]} : vector<32x512xf32> to vector<1x512xf32>
    %171 = vector.extract_strided_slice %47 {offsets = [0, 20], sizes = [4, 1], strides = [1, 1]} : vector<4x32xf32> to vector<4x1xf32>
    %172 = vector.broadcast %170 : vector<1x512xf32> to vector<4x512xf32>
    %173 = vector.broadcast %171 : vector<4x1xf32> to vector<4x512xf32>
    %174 = arith.mulf %172, %173 : vector<4x512xf32>
    %175 = arith.addf %169, %174 : vector<4x512xf32>
    %176 = vector.extract_strided_slice %46 {offsets = [21, 0], sizes = [1, 512], strides = [1, 1]} : vector<32x512xf32> to vector<1x512xf32>
    %177 = vector.extract_strided_slice %47 {offsets = [0, 21], sizes = [4, 1], strides = [1, 1]} : vector<4x32xf32> to vector<4x1xf32>
    %178 = vector.broadcast %176 : vector<1x512xf32> to vector<4x512xf32>
    %179 = vector.broadcast %177 : vector<4x1xf32> to vector<4x512xf32>
    %180 = arith.mulf %178, %179 : vector<4x512xf32>
    %181 = arith.addf %175, %180 : vector<4x512xf32>
    %182 = vector.extract_strided_slice %46 {offsets = [22, 0], sizes = [1, 512], strides = [1, 1]} : vector<32x512xf32> to vector<1x512xf32>
    %183 = vector.extract_strided_slice %47 {offsets = [0, 22], sizes = [4, 1], strides = [1, 1]} : vector<4x32xf32> to vector<4x1xf32>
    %184 = vector.broadcast %182 : vector<1x512xf32> to vector<4x512xf32>
    %185 = vector.broadcast %183 : vector<4x1xf32> to vector<4x512xf32>
    %186 = arith.mulf %184, %185 : vector<4x512xf32>
    %187 = arith.addf %181, %186 : vector<4x512xf32>
    %188 = vector.extract_strided_slice %46 {offsets = [23, 0], sizes = [1, 512], strides = [1, 1]} : vector<32x512xf32> to vector<1x512xf32>
    %189 = vector.extract_strided_slice %47 {offsets = [0, 23], sizes = [4, 1], strides = [1, 1]} : vector<4x32xf32> to vector<4x1xf32>
    %190 = vector.broadcast %188 : vector<1x512xf32> to vector<4x512xf32>
    %191 = vector.broadcast %189 : vector<4x1xf32> to vector<4x512xf32>
    %192 = arith.mulf %190, %191 : vector<4x512xf32>
    %193 = arith.addf %187, %192 : vector<4x512xf32>
    %194 = vector.extract_strided_slice %46 {offsets = [24, 0], sizes = [1, 512], strides = [1, 1]} : vector<32x512xf32> to vector<1x512xf32>
    %195 = vector.extract_strided_slice %47 {offsets = [0, 24], sizes = [4, 1], strides = [1, 1]} : vector<4x32xf32> to vector<4x1xf32>
    %196 = vector.broadcast %194 : vector<1x512xf32> to vector<4x512xf32>
    %197 = vector.broadcast %195 : vector<4x1xf32> to vector<4x512xf32>
    %198 = arith.mulf %196, %197 : vector<4x512xf32>
    %199 = arith.addf %193, %198 : vector<4x512xf32>
    %200 = vector.extract_strided_slice %46 {offsets = [25, 0], sizes = [1, 512], strides = [1, 1]} : vector<32x512xf32> to vector<1x512xf32>
    %201 = vector.extract_strided_slice %47 {offsets = [0, 25], sizes = [4, 1], strides = [1, 1]} : vector<4x32xf32> to vector<4x1xf32>
    %202 = vector.broadcast %200 : vector<1x512xf32> to vector<4x512xf32>
    %203 = vector.broadcast %201 : vector<4x1xf32> to vector<4x512xf32>
    %204 = arith.mulf %202, %203 : vector<4x512xf32>
    %205 = arith.addf %199, %204 : vector<4x512xf32>
    %206 = vector.extract_strided_slice %46 {offsets = [26, 0], sizes = [1, 512], strides = [1, 1]} : vector<32x512xf32> to vector<1x512xf32>
    %207 = vector.extract_strided_slice %47 {offsets = [0, 26], sizes = [4, 1], strides = [1, 1]} : vector<4x32xf32> to vector<4x1xf32>
    %208 = vector.broadcast %206 : vector<1x512xf32> to vector<4x512xf32>
    %209 = vector.broadcast %207 : vector<4x1xf32> to vector<4x512xf32>
    %210 = arith.mulf %208, %209 : vector<4x512xf32>
    %211 = arith.addf %205, %210 : vector<4x512xf32>
    %212 = vector.extract_strided_slice %46 {offsets = [27, 0], sizes = [1, 512], strides = [1, 1]} : vector<32x512xf32> to vector<1x512xf32>
    %213 = vector.extract_strided_slice %47 {offsets = [0, 27], sizes = [4, 1], strides = [1, 1]} : vector<4x32xf32> to vector<4x1xf32>
    %214 = vector.broadcast %212 : vector<1x512xf32> to vector<4x512xf32>
    %215 = vector.broadcast %213 : vector<4x1xf32> to vector<4x512xf32>
    %216 = arith.mulf %214, %215 : vector<4x512xf32>
    %217 = arith.addf %211, %216 : vector<4x512xf32>
    %218 = vector.extract_strided_slice %46 {offsets = [28, 0], sizes = [1, 512], strides = [1, 1]} : vector<32x512xf32> to vector<1x512xf32>
    %219 = vector.extract_strided_slice %47 {offsets = [0, 28], sizes = [4, 1], strides = [1, 1]} : vector<4x32xf32> to vector<4x1xf32>
    %220 = vector.broadcast %218 : vector<1x512xf32> to vector<4x512xf32>
    %221 = vector.broadcast %219 : vector<4x1xf32> to vector<4x512xf32>
    %222 = arith.mulf %220, %221 : vector<4x512xf32>
    %223 = arith.addf %217, %222 : vector<4x512xf32>
    %224 = vector.extract_strided_slice %46 {offsets = [29, 0], sizes = [1, 512], strides = [1, 1]} : vector<32x512xf32> to vector<1x512xf32>
    %225 = vector.extract_strided_slice %47 {offsets = [0, 29], sizes = [4, 1], strides = [1, 1]} : vector<4x32xf32> to vector<4x1xf32>
    %226 = vector.broadcast %224 : vector<1x512xf32> to vector<4x512xf32>
    %227 = vector.broadcast %225 : vector<4x1xf32> to vector<4x512xf32>
    %228 = arith.mulf %226, %227 : vector<4x512xf32>
    %229 = arith.addf %223, %228 : vector<4x512xf32>
    %230 = vector.extract_strided_slice %46 {offsets = [30, 0], sizes = [1, 512], strides = [1, 1]} : vector<32x512xf32> to vector<1x512xf32>
    %231 = vector.extract_strided_slice %47 {offsets = [0, 30], sizes = [4, 1], strides = [1, 1]} : vector<4x32xf32> to vector<4x1xf32>
    %232 = vector.broadcast %230 : vector<1x512xf32> to vector<4x512xf32>
    %233 = vector.broadcast %231 : vector<4x1xf32> to vector<4x512xf32>
    %234 = arith.mulf %232, %233 : vector<4x512xf32>
    %235 = arith.addf %229, %234 : vector<4x512xf32>
    %236 = vector.extract_strided_slice %46 {offsets = [31, 0], sizes = [1, 512], strides = [1, 1]} : vector<32x512xf32> to vector<1x512xf32>
    %237 = vector.extract_strided_slice %47 {offsets = [0, 31], sizes = [4, 1], strides = [1, 1]} : vector<4x32xf32> to vector<4x1xf32>
    %238 = vector.broadcast %236 : vector<1x512xf32> to vector<4x512xf32>
    %239 = vector.broadcast %237 : vector<4x1xf32> to vector<4x512xf32>
    %240 = arith.mulf %238, %239 : vector<4x512xf32>
    %241 = arith.addf %235, %240 : vector<4x512xf32>
    %242 = vector.extract_strided_slice %241 {offsets = [0, 0], sizes = [2, 512], strides = [1, 1]} : vector<4x512xf32> to vector<2x512xf32>
    %243 = vector.extract_strided_slice %241 {offsets = [2, 0], sizes = [2, 512], strides = [1, 1]} : vector<4x512xf32> to vector<2x512xf32>
    %244 = math.exp %242 : vector<2x512xf32>
    %245 = arith.mulf %29, %244 : vector<2x512xf32>
    %246 = arith.addf %245, %243 : vector<2x512xf32>
    %c0_8 = arith.constant 0 : index
    %c0_9 = arith.constant 0 : index
    %247 = vector.load %arg3[%c0_8, %c0_9] : memref<4x512xf32, #tpu.memory_space<vmem>>, vector<2x512xf32>
    tpu.vector_store %arg3[%c0_8, %c0_9], %28 {strides = array<i32>} : memref<4x512xf32, #tpu.memory_space<vmem>>, vector<2x512xf32>,
    %c2 = arith.constant 2 : index
    %c0_10 = arith.constant 0 : index
    %248 = vector.load %arg3[%c2, %c0_10] : memref<4x512xf32, #tpu.memory_space<vmem>>, vector<2x512xf32>
    tpu.vector_store %arg3[%c2, %c0_10], %246 {strides = array<i32>} : memref<4x512xf32, #tpu.memory_space<vmem>>, vector<2x512xf32>,
    %249 = vector.extract_strided_slice %242 {offsets = [0, 0], sizes = [2, 256], strides = [1, 1]} : vector<2x512xf32> to vector<2x256xf32>
    %cst_11 = arith.constant dense<0.000000e+00> : vector<2xf32>
    %250 = vector.multi_reduction <add>, %249, %cst_11 [1] : vector<2x256xf32> to vector<2xf32>
    %251 = vector.shape_cast %250 : vector<2xf32> to vector<2x1xf32>
    %cst_12 = arith.constant dense<0.000000e+00> : vector<1xf32>
    %252 = vector.multi_reduction <add>, %251, %cst_12 [0] : vector<2x1xf32> to vector<1xf32>
    %253 = vector.shape_cast %252 : vector<1xf32> to vector<1x1xf32>
    %254 = vector.extract_strided_slice %242 {offsets = [0, 256], sizes = [2, 256], strides = [1, 1]} : vector<2x512xf32> to vector<2x256xf32>
    %cst_13 = arith.constant dense<0.000000e+00> : vector<2xf32>
    %255 = vector.multi_reduction <add>, %254, %cst_13 [1] : vector<2x256xf32> to vector<2xf32>
    %256 = vector.shape_cast %255 : vector<2xf32> to vector<2x1xf32>
    %cst_14 = arith.constant dense<0.000000e+00> : vector<1xf32>
    %257 = vector.multi_reduction <add>, %256, %cst_14 [0] : vector<2x1xf32> to vector<1xf32>
    %258 = vector.shape_cast %257 : vector<1xf32> to vector<1x1xf32>
    %259 = tpu.concatenate %253, %258 in 1 : vector<1x1xf32>, vector<1x1xf32> -> vector<1x2xf32>
    %c0_15 = arith.constant 0 : index
    %c0_16 = arith.constant 0 : index
    %260 = vector.load %arg4[%c0_15, %c0_16] : memref<1x2xf32, #tpu.memory_space<vmem>>, vector<1x2xf32>
    tpu.vector_store %arg4[%c0_15, %c0_16], %259 {strides = array<i32>} : memref<1x2xf32, #tpu.memory_space<vmem>>, vector<1x2xf32>,
    return
  }
  func.func @transform_0(%arg0: i32) -> (i32, i32) {
    %c0_i32 = arith.constant 0 : i32
    %c0_i32_0 = arith.constant 0 : i32
    %c0_i32_1 = arith.constant 0 : i32
    return %c0_i32, %c0_i32_0 : i32, i32
  }
  func.func @transform_1(%arg0: i32) -> (i32, i32) {
    %c0_i32 = arith.constant 0 : i32
    %c0_i32_0 = arith.constant 0 : i32
    %c0_i32_1 = arith.constant 0 : i32
    return %c0_i32, %c0_i32_0 : i32, i32
  }
  func.func @transform_2(%arg0: i32) -> (i32, i32) {
    %c0_i32 = arith.constant 0 : i32
    %c0_i32_0 = arith.constant 0 : i32
    %c0_i32_1 = arith.constant 0 : i32
    return %c0_i32, %c0_i32_0 : i32, i32
  }
  func.func @transform_3(%arg0: i32) -> (i32, i32) {
    %c0_i32 = arith.constant 0 : i32
    %c0_i32_0 = arith.constant 0 : i32
    %c0_i32_1 = arith.constant 0 : i32
    return %c0_i32, %c0_i32_0 : i32, i32
  }
}

</mosaic_0001>

<llo_original>
// kernel: tpu_custom_call.1
$region0: #{tpu_custom_call.1}
  #allocation0 [shape = 'u32[]', space=smem, size = 0x4, offset = 0x4, fixed_abs, tag = 'smem constant byte address 0x4 - core index']
  #allocation1 [shape = 'u32[144,128]{1,0:T(1,128)}', space=vmem, size = 0x12000, scoped, tag = 'internal scratch']
  %s0 = inlined_call_operand.hbm [shape: f32[4,512], index: 0, kind: input, shape index: {}]
  %s1 = inlined_call_operand.hbm [shape: f32[32,128], index: 1, kind: input, shape index: {}]
  %s2 = inlined_call_operand.hbm [shape: f32[4,512], index: 2, kind: output, shape index: {0}]
  %s3 = inlined_call_operand.hbm [shape: f32[1,2], index: 3, kind: output, shape index: {1}]
  %4 = xla_tuple %s2, %s3
  %s5 = sld [smem:[#allocation0]]
  $region34: #{tpu_custom_call.1} parent=0
    _
  %s7 = ssub.s32 1, %s5
  %s8 = scalar_select 0, %s7, %s5
  $region1: #{tpu_custom_call.1} parent=0
    #allocation2 [shape = 'u8[8192]{0}', space=vmem, size = 0x2000, scoped, tag = 'input window, operand 0, single buffered']
    #allocation3 [shape = 's32[1]{0}', space=sflag, size = 0x4, scoped, tag = 'scoped memory for tpu_custom_call.1']
    #allocation4 [shape = 's32[1]{0}', space=sflag, size = 0x4, scoped, tag = 'scoped memory for tpu_custom_call.1']
    #allocation5 [shape = 'u8[16384]{0}', space=vmem, size = 0x4000, scoped, tag = 'input window, operand 1, single buffered']
    #allocation6 [shape = 's32[1]{0}', space=sflag, size = 0x4, scoped, tag = 'scoped memory for tpu_custom_call.1']
    #allocation7 [shape = 'u8[8192]{0}', space=vmem, size = 0x2000, scoped, tag = 'output window, operand 0, single buffered']
    #allocation8 [shape = 'u8[512]{0}', space=vmem, size = 0x400, scoped, tag = 'output window, operand 1, single buffered']
    #allocation9 [shape = 's32[1]{0}', space=sflag, size = 0x4, scoped, tag = 'scoped memory for tpu_custom_call.1']
    %9 = vsyncpa [#allocation3], 0
    %10 = vsyncpa [#allocation6], 0
    %11 = vsyncpa [#allocation4], 0
    %12 = vsyncpa [#allocation9], 0
    // Predicated region
    $region2: #{tpu_custom_call.1} parent=1 // pred_check
      _
    $region3: #{tpu_custom_call.1} parent=1 // pred_check_branch
      %14 = sbr.rel (0) target = $region5
    $region4: #{tpu_custom_call.1} parent=1 // pred_region
      %s16 = ssub.s32 256, 256
      %17 = vsyncadd [#allocation3], %s16
      %s19 = sshll.u32 [#allocation2], 4
      %s20 = int_to_ptr.vmem [resolvable:$true] %s19
      %22 = dma.hbm_to_vmem [thread:$0]  %s0, 256, %s20, [#allocation3]
    $region5: #{tpu_custom_call.1} parent=1 // pred_fallthru
      _
    // Predicated region
    $region6: #{tpu_custom_call.1} parent=1 // pred_check
      _
    $region7: #{tpu_custom_call.1} parent=1 // pred_check_branch
      %24 = sbr.rel (0) target = $region9
    $region8: #{tpu_custom_call.1} parent=1 // pred_region
      %s26 = ssub.s32 512, 512
      %27 = vsyncadd [#allocation6], %s26
      %s28 = sshll.u32 [#allocation5], 4
      %s29 = int_to_ptr.vmem [resolvable:$true] %s28
      %34 = dma.hbm_to_vmem [thread:$0]  %s1, 512, %s29, [#allocation6], 128, 128, 8
    $region9: #{tpu_custom_call.1} parent=1 // pred_fallthru
      _
    // Predicated region
    $region10: #{tpu_custom_call.1} parent=1 // pred_check
      _
    $region11: #{tpu_custom_call.1} parent=1 // pred_check_branch
      %36 = sbr.rel (0) target = $region13
    $region12: #{tpu_custom_call.1} parent=1 // pred_region
      %37 = dma.done [#allocation3], 256
    $region13: #{tpu_custom_call.1} parent=1 // pred_fallthru
      _
    // Predicated region
    $region14: #{tpu_custom_call.1} parent=1 // pred_check
      _
    $region15: #{tpu_custom_call.1} parent=1 // pred_check_branch
      %39 = sbr.rel (0) target = $region17
    $region16: #{tpu_custom_call.1} parent=1 // pred_region
      %40 = dma.done [#allocation6], 512
    $region17: #{tpu_custom_call.1} parent=1 // pred_fallthru
      _
    %v41 = vld [vmem:[#allocation2] sm:$0xff]
    %v42 = vld [vmem:[#allocation2 + $0x8] sm:$0xff]
    %v43 = vld [vmem:[#allocation5] sm:$0xf]
    %v46 = vlaneseq
    %v47 = vshrl.u32 %v46, 7
    %v48 = vsub.s32 0, %v47
    %v49 = vrot.slane %v41, %v48
    %v50 = vlaneseq
    %v51 = vshrl.u32 %v50, 7
    %v52 = vsub.s32 4, %v51
    %v53 = vrot.slane %v41, %v52
    %v54 = vlaneseq
    %v55 = vshrl.u32 %v54, 7
    %v56 = vsub.s32 0, %v55
    %v57 = vrot.slane %v42, %v56
    %v58 = vlaneseq
    %v59 = vshrl.u32 %v58, 7
    %v60 = vsub.s32 4, %v59
    %v61 = vrot.slane %v42, %v60
    %v66 = vlaneseq
    %v67 = vshrl.u32 %v66, 7
    %v68 = vsub.s32 0, %v67
    %v69 = vrot.slane %v49, %v68
    %v70 = vlaneseq
    %v71 = vshrl.u32 %v70, 7
    %v72 = vsub.s32 0, %v71
    %v73 = vrot.slane %v53, %v72
    %v74 = vlaneseq
    %v75 = vshrl.u32 %v74, 7
    %v76 = vsub.s32 0, %v75
    %v77 = vrot.slane %v57, %v76
    %v78 = vlaneseq
    %v79 = vshrl.u32 %v78, 7
    %v80 = vsub.s32 0, %v79
    %v81 = vrot.slane %v61, %v80
    %83 = vset.pattern.permute.xlu0 0
    %84 = vperm.xlu0 %83, %v43
    %v85 = vpop.permute.xlu0 %84
    %v87 = vmul.f32 %v69, %v85
    %v88 = vmul.f32 %v73, %v85
    %v89 = vmul.f32 %v77, %v85
    %v90 = vmul.f32 %v81, %v85
    %91 = vset.pattern.permute.xlu0 4
    %92 = vperm.xlu0 %91, %v43
    %v93 = vpop.permute.xlu0 %92
    %v95 = vadd.f32 %v93, %v87
    %v96 = vadd.f32 %v93, %v88
    %v97 = vadd.f32 %v93, %v89
    %v98 = vadd.f32 %v93, %v90
    %v99 = vlaneseq
    %v100 = vshrl.u32 %v99, 7
    %v101 = vsub.s32 1, %v100
    %v102 = vrot.slane %v41, %v101
    %v103 = vlaneseq
    %v104 = vshrl.u32 %v103, 7
    %v105 = vsub.s32 5, %v104
    %v106 = vrot.slane %v41, %v105
    %v107 = vlaneseq
    %v108 = vshrl.u32 %v107, 7
    %v109 = vsub.s32 1, %v108
    %v110 = vrot.slane %v42, %v109
    %v111 = vlaneseq
    %v112 = vshrl.u32 %v111, 7
    %v113 = vsub.s32 5, %v112
    %v114 = vrot.slane %v42, %v113
    %v119 = vlaneseq
    %v120 = vshrl.u32 %v119, 7
    %v121 = vsub.s32 1, %v120
    %v122 = vrot.slane %v102, %v121
    %v123 = vlaneseq
    %v124 = vshrl.u32 %v123, 7
    %v125 = vsub.s32 1, %v124
    %v126 = vrot.slane %v106, %v125
    %v127 = vlaneseq
    %v128 = vshrl.u32 %v127, 7
    %v129 = vsub.s32 1, %v128
    %v130 = vrot.slane %v110, %v129
    %v131 = vlaneseq
    %v132 = vshrl.u32 %v131, 7
    %v133 = vsub.s32 1, %v132
    %v134 = vrot.slane %v114, %v133
    %135 = vset.pattern.permute.xlu0 1
    %136 = vperm.xlu0 %135, %v43
    %v137 = vpop.permute.xlu0 %136
    %v139 = vmul.f32 %v122, %v137
    %v140 = vmul.f32 %v126, %v137
    %v141 = vmul.f32 %v130, %v137
    %v142 = vmul.f32 %v134, %v137
    %v143 = vadd.f32 %v95, %v139
    %v144 = vadd.f32 %v96, %v140
    %v145 = vadd.f32 %v97, %v141
    %v146 = vadd.f32 %v98, %v142
    %v147 = vlaneseq
    %v148 = vshrl.u32 %v147, 7
    %v149 = vsub.s32 2, %v148
    %v150 = vrot.slane %v41, %v149
    %v151 = vlaneseq
    %v152 = vshrl.u32 %v151, 7
    %v153 = vsub.s32 6, %v152
    %v154 = vrot.slane %v41, %v153
    %v155 = vlaneseq
    %v156 = vshrl.u32 %v155, 7
    %v157 = vsub.s32 2, %v156
    %v158 = vrot.slane %v42, %v157
    %v159 = vlaneseq
    %v160 = vshrl.u32 %v159, 7
    %v161 = vsub.s32 6, %v160
    %v162 = vrot.slane %v42, %v161
    %v167 = vlaneseq
    %v168 = vshrl.u32 %v167, 7
    %v169 = vsub.s32 2, %v168
    %v170 = vrot.slane %v150, %v169
    %v171 = vlaneseq
    %v172 = vshrl.u32 %v171, 7
    %v173 = vsub.s32 2, %v172
    %v174 = vrot.slane %v154, %v173
    %v175 = vlaneseq
    %v176 = vshrl.u32 %v175, 7
    %v177 = vsub.s32 2, %v176
    %v178 = vrot.slane %v158, %v177
    %v179 = vlaneseq
    %v180 = vshrl.u32 %v179, 7
    %v181 = vsub.s32 2, %v180
    %v182 = vrot.slane %v162, %v181
    %183 = vset.pattern.permute.xlu0 2
    %184 = vperm.xlu0 %183, %v43
    %v185 = vpop.permute.xlu0 %184
    %v187 = vmul.f32 %v170, %v185
    %v188 = vmul.f32 %v174, %v185
    %v189 = vmul.f32 %v178, %v185
    %v190 = vmul.f32 %v182, %v185
    %v191 = vadd.f32 %v143, %v187
    %v192 = vadd.f32 %v144, %v188
    %v193 = vadd.f32 %v145, %v189
    %v194 = vadd.f32 %v146, %v190
    %v195 = vlaneseq
    %v196 = vshrl.u32 %v195, 7
    %v197 = vsub.s32 3, %v196
    %v198 = vrot.slane %v41, %v197
    %v199 = vlaneseq
    %v200 = vshrl.u32 %v199, 7
    %v201 = vsub.s32 7, %v200
    %v202 = vrot.slane %v41, %v201
    %v203 = vlaneseq
    %v204 = vshrl.u32 %v203, 7
    %v205 = vsub.s32 3, %v204
    %v206 = vrot.slane %v42, %v205
    %v207 = vlaneseq
    %v208 = vshrl.u32 %v207, 7
    %v209 = vsub.s32 7, %v208
    %v210 = vrot.slane %v42, %v209
    %v215 = vlaneseq
    %v216 = vshrl.u32 %v215, 7
    %v217 = vsub.s32 3, %v216
    %v218 = vrot.slane %v198, %v217
    %v219 = vlaneseq
    %v220 = vshrl.u32 %v219, 7
    %v221 = vsub.s32 3, %v220
    %v222 = vrot.slane %v202, %v221
    %v223 = vlaneseq
    %v224 = vshrl.u32 %v223, 7
    %v225 = vsub.s32 3, %v224
    %v226 = vrot.slane %v206, %v225
    %v227 = vlaneseq
    %v228 = vshrl.u32 %v227, 7
    %v229 = vsub.s32 3, %v228
    %v230 = vrot.slane %v210, %v229
    %231 = vset.pattern.permute.xlu0 3
    %232 = vperm.xlu0 %231, %v43
    %v233 = vpop.permute.xlu0 %232
    %v235 = vmul.f32 %v218, %v233
    %v236 = vmul.f32 %v222, %v233
    %v237 = vmul.f32 %v226, %v233
    %v238 = vmul.f32 %v230, %v233
    %v239 = vadd.f32 %v191, %v235
    %v240 = vadd.f32 %v192, %v236
    %v241 = vadd.f32 %v193, %v237
    %v242 = vadd.f32 %v194, %v238
    %v243 = vld [vmem:[#allocation5] sm:$0xff]
    %v244 = vld [vmem:[#allocation5 + $0x8] sm:$0xff]
    %v245 = vld [vmem:[#allocation5 + $0x10] sm:$0xff]
    %v246 = vld [vmem:[#allocation5 + $0x18] sm:$0xff]
    %v247 = vlaneseq
    %v248 = vshrl.u32 %v247, 7
    %v249 = vsub.s32 0, %v248
    %v250 = vrot.slane %v239, %v249
    %v251 = vlaneseq
    %v252 = vshrl.u32 %v251, 7
    %v253 = vsub.s32 0, %v252
    %v254 = vrot.slane %v240, %v253
    %v255 = vlaneseq
    %v256 = vshrl.u32 %v255, 7
    %v257 = vsub.s32 0, %v256
    %v258 = vrot.slane %v241, %v257
    %v259 = vlaneseq
    %v260 = vshrl.u32 %v259, 7
    %v261 = vsub.s32 0, %v260
    %v262 = vrot.slane %v242, %v261
    %264 = vset.pattern.permute.xlu0 5
    %265 = vperm.xlu0 %264, %v243
    %v266 = vpop.permute.xlu0 %265
    %269 = vset.pattern.permute.xlu0 5
    %270 = vperm.xlu0 %269, %v244
    %v271 = vpop.permute.xlu0 %270
    %274 = vset.pattern.permute.xlu0 5
    %275 = vperm.xlu0 %274, %v245
    %v276 = vpop.permute.xlu0 %275
    %279 = vset.pattern.permute.xlu0 5
    %280 = vperm.xlu0 %279, %v246
    %v281 = vpop.permute.xlu0 %280
    %v283 = vmul.f32 %v250, %v266
    %v284 = vmul.f32 %v254, %v266
    %v285 = vmul.f32 %v258, %v266
    %v286 = vmul.f32 %v262, %v266
    %v287 = vmul.f32 %v250, %v271
    %v288 = vmul.f32 %v254, %v271
    %v289 = vmul.f32 %v258, %v271
    %v290 = vmul.f32 %v262, %v271
    %v291 = vmul.f32 %v250, %v276
    %v292 = vmul.f32 %v254, %v276
    %v293 = vmul.f32 %v258, %v276
    %v294 = vmul.f32 %v262, %v276
    %v295 = vmul.f32 %v250, %v281
    %v296 = vmul.f32 %v254, %v281
    %v297 = vmul.f32 %v258, %v281
    %v298 = vmul.f32 %v262, %v281
    %299 = vset.pattern.permute.xlu0 7
    %300 = vperm.xlu0 %299, %v243
    %v301 = vpop.permute.xlu0 %300
    %303 = vset.pattern.permute.xlu0 7
    %304 = vperm.xlu0 %303, %v244
    %v305 = vpop.permute.xlu0 %304
    %307 = vset.pattern.permute.xlu0 7
    %308 = vperm.xlu0 %307, %v245
    %v309 = vpop.permute.xlu0 %308
    %311 = vset.pattern.permute.xlu0 7
    %312 = vperm.xlu0 %311, %v246
    %v313 = vpop.permute.xlu0 %312
    %v315 = vadd.f32 %v301, %v283
    %v316 = vadd.f32 %v301, %v284
    %v317 = vadd.f32 %v301, %v285
    %v318 = vadd.f32 %v301, %v286
    %v319 = vadd.f32 %v305, %v287
    %v320 = vadd.f32 %v305, %v288
    %v321 = vadd.f32 %v305, %v289
    %v322 = vadd.f32 %v305, %v290
    %v323 = vadd.f32 %v309, %v291
    %v324 = vadd.f32 %v309, %v292
    %v325 = vadd.f32 %v309, %v293
    %v326 = vadd.f32 %v309, %v294
    %v327 = vadd.f32 %v313, %v295
    %v328 = vadd.f32 %v313, %v296
    %v329 = vadd.f32 %v313, %v297
    %v330 = vadd.f32 %v313, %v298
    %v331 = vlaneseq
    %v332 = vshrl.u32 %v331, 7
    %v333 = vsub.s32 1, %v332
    %v334 = vrot.slane %v239, %v333
    %v335 = vlaneseq
    %v336 = vshrl.u32 %v335, 7
    %v337 = vsub.s32 1, %v336
    %v338 = vrot.slane %v240, %v337
    %v339 = vlaneseq
    %v340 = vshrl.u32 %v339, 7
    %v341 = vsub.s32 1, %v340
    %v342 = vrot.slane %v241, %v341
    %v343 = vlaneseq
    %v344 = vshrl.u32 %v343, 7
    %v345 = vsub.s32 1, %v344
    %v346 = vrot.slane %v242, %v345
    %347 = vset.pattern.permute.xlu0 6
    %348 = vperm.xlu0 %347, %v243
    %v349 = vpop.permute.xlu0 %348
    %351 = vset.pattern.permute.xlu0 6
    %352 = vperm.xlu0 %351, %v244
    %v353 = vpop.permute.xlu0 %352
    %355 = vset.pattern.permute.xlu0 6
    %356 = vperm.xlu0 %355, %v245
    %v357 = vpop.permute.xlu0 %356
    %359 = vset.pattern.permute.xlu0 6
    %360 = vperm.xlu0 %359, %v246
    %v361 = vpop.permute.xlu0 %360
    %v363 = vmul.f32 %v334, %v349
    %v364 = vmul.f32 %v338, %v349
    %v365 = vmul.f32 %v342, %v349
    %v366 = vmul.f32 %v346, %v349
    %v367 = vmul.f32 %v334, %v353
    %v368 = vmul.f32 %v338, %v353
    %v369 = vmul.f32 %v342, %v353
    %v370 = vmul.f32 %v346, %v353
    %v371 = vmul.f32 %v334, %v357
    %v372 = vmul.f32 %v338, %v357
    %v373 = vmul.f32 %v342, %v357
    %v374 = vmul.f32 %v346, %v357
    %v375 = vmul.f32 %v334, %v361
    %v376 = vmul.f32 %v338, %v361
    %v377 = vmul.f32 %v342, %v361
    %v378 = vmul.f32 %v346, %v361
    %v379 = vadd.f32 %v315, %v363
    %v380 = vadd.f32 %v316, %v364
    %v381 = vadd.f32 %v317, %v365
    %v382 = vadd.f32 %v318, %v366
    %v383 = vadd.f32 %v319, %v367
    %v384 = vadd.f32 %v320, %v368
    %v385 = vadd.f32 %v321, %v369
    %v386 = vadd.f32 %v322, %v370
    %v387 = vadd.f32 %v323, %v371
    %v388 = vadd.f32 %v324, %v372
    %v389 = vadd.f32 %v325, %v373
    %v390 = vadd.f32 %v326, %v374
    %v391 = vadd.f32 %v327, %v375
    %v392 = vadd.f32 %v328, %v376
    %v393 = vadd.f32 %v329, %v377
    %v394 = vadd.f32 %v330, %v378
    %v395 = vmax.f32 %v379, 0.0
    %v396 = vmax.f32 %v380, 0.0
    %v397 = vmax.f32 %v381, 0.0
    %v398 = vmax.f32 %v382, 0.0
    %v399 = vmax.f32 %v383, 0.0
    %v400 = vmax.f32 %v384, 0.0
    %v401 = vmax.f32 %v385, 0.0
    %v402 = vmax.f32 %v386, 0.0
    %v403 = vmax.f32 %v387, 0.0
    %v404 = vmax.f32 %v388, 0.0
    %v405 = vmax.f32 %v389, 0.0
    %v406 = vmax.f32 %v390, 0.0
    %v407 = vmax.f32 %v391, 0.0
    %v408 = vmax.f32 %v392, 0.0
    %v409 = vmax.f32 %v393, 0.0
    %v410 = vmax.f32 %v394, 0.0
    %v411 = vlaneseq
    %v412 = vshrl.u32 %v411, 7
    %v413 = vsub.s32 0, %v412
    %v414 = vrot.slane %v395, %v413
    %v415 = vlaneseq
    %v416 = vshrl.u32 %v415, 7
    %v417 = vsub.s32 0, %v416
    %v418 = vrot.slane %v396, %v417
    %v419 = vlaneseq
    %v420 = vshrl.u32 %v419, 7
    %v421 = vsub.s32 0, %v420
    %v422 = vrot.slane %v397, %v421
    %v423 = vlaneseq
    %v424 = vshrl.u32 %v423, 7
    %v425 = vsub.s32 0, %v424
    %v426 = vrot.slane %v398, %v425
    %427 = vset.pattern.permute.xlu0 8
    %428 = vperm.xlu0 %427, %v43
    %v429 = vpop.permute.xlu0 %428
    %v431 = vmul.f32 %v414, %v429
    %v432 = vmul.f32 %v418, %v429
    %v433 = vmul.f32 %v422, %v429
    %v434 = vmul.f32 %v426, %v429
    %435 = vset.pattern.permute.xlu0 40
    %436 = vperm.xlu0 %435, %v43
    %v437 = vpop.permute.xlu0 %436
    %v439 = vadd.f32 %v437, %v431
    %v440 = vadd.f32 %v437, %v432
    %v441 = vadd.f32 %v437, %v433
    %v442 = vadd.f32 %v437, %v434
    %v443 = vlaneseq
    %v444 = vshrl.u32 %v443, 7
    %v445 = vsub.s32 1, %v444
    %v446 = vrot.slane %v395, %v445
    %v447 = vlaneseq
    %v448 = vshrl.u32 %v447, 7
    %v449 = vsub.s32 1, %v448
    %v450 = vrot.slane %v396, %v449
    %v451 = vlaneseq
    %v452 = vshrl.u32 %v451, 7
    %v453 = vsub.s32 1, %v452
    %v454 = vrot.slane %v397, %v453
    %v455 = vlaneseq
    %v456 = vshrl.u32 %v455, 7
    %v457 = vsub.s32 1, %v456
    %v458 = vrot.slane %v398, %v457
    %459 = vset.pattern.permute.xlu0 9
    %460 = vperm.xlu0 %459, %v43
    %v461 = vpop.permute.xlu0 %460
    %v463 = vmul.f32 %v446, %v461
    %v464 = vmul.f32 %v450, %v461
    %v465 = vmul.f32 %v454, %v461
    %v466 = vmul.f32 %v458, %v461
    %v467 = vadd.f32 %v439, %v463
    %v468 = vadd.f32 %v440, %v464
    %v469 = vadd.f32 %v441, %v465
    %v470 = vadd.f32 %v442, %v466
    %v471 = vlaneseq
    %v472 = vshrl.u32 %v471, 7
    %v473 = vsub.s32 2, %v472
    %v474 = vrot.slane %v395, %v473
    %v475 = vlaneseq
    %v476 = vshrl.u32 %v475, 7
    %v477 = vsub.s32 2, %v476
    %v478 = vrot.slane %v396, %v477
    %v479 = vlaneseq
    %v480 = vshrl.u32 %v479, 7
    %v481 = vsub.s32 2, %v480
    %v482 = vrot.slane %v397, %v481
    %v483 = vlaneseq
    %v484 = vshrl.u32 %v483, 7
    %v485 = vsub.s32 2, %v484
    %v486 = vrot.slane %v398, %v485
    %487 = vset.pattern.permute.xlu0 10
    %488 = vperm.xlu0 %487, %v43
    %v489 = vpop.permute.xlu0 %488
    %v491 = vmul.f32 %v474, %v489
    %v492 = vmul.f32 %v478, %v489
    %v493 = vmul.f32 %v482, %v489
    %v494 = vmul.f32 %v486, %v489
    %v495 = vadd.f32 %v467, %v491
    %v496 = vadd.f32 %v468, %v492
    %v497 = vadd.f32 %v469, %v493
    %v498 = vadd.f32 %v470, %v494
    %v499 = vlaneseq
    %v500 = vshrl.u32 %v499, 7
    %v501 = vsub.s32 3, %v500
    %v502 = vrot.slane %v395, %v501
    %v503 = vlaneseq
    %v504 = vshrl.u32 %v503, 7
    %v505 = vsub.s32 3, %v504
    %v506 = vrot.slane %v396, %v505
    %v507 = vlaneseq
    %v508 = vshrl.u32 %v507, 7
    %v509 = vsub.s32 3, %v508
    %v510 = vrot.slane %v397, %v509
    %v511 = vlaneseq
    %v512 = vshrl.u32 %v511, 7
    %v513 = vsub.s32 3, %v512
    %v514 = vrot.slane %v398, %v513
    %515 = vset.pattern.permute.xlu0 11
    %516 = vperm.xlu0 %515, %v43
    %v517 = vpop.permute.xlu0 %516
    %v519 = vmul.f32 %v502, %v517
    %v520 = vmul.f32 %v506, %v517
    %v521 = vmul.f32 %v510, %v517
    %v522 = vmul.f32 %v514, %v517
    %v523 = vadd.f32 %v495, %v519
    %v524 = vadd.f32 %v496, %v520
    %v525 = vadd.f32 %v497, %v521
    %v526 = vadd.f32 %v498, %v522
    %v527 = vlaneseq
    %v528 = vshrl.u32 %v527, 7
    %v529 = vsub.s32 4, %v528
    %v530 = vrot.slane %v395, %v529
    %v531 = vlaneseq
    %v532 = vshrl.u32 %v531, 7
    %v533 = vsub.s32 4, %v532
    %v534 = vrot.slane %v396, %v533
    %v535 = vlaneseq
    %v536 = vshrl.u32 %v535, 7
    %v537 = vsub.s32 4, %v536
    %v538 = vrot.slane %v397, %v537
    %v539 = vlaneseq
    %v540 = vshrl.u32 %v539, 7
    %v541 = vsub.s32 4, %v540
    %v542 = vrot.slane %v398, %v541
    %543 = vset.pattern.permute.xlu0 12
    %544 = vperm.xlu0 %543, %v43
    %v545 = vpop.permute.xlu0 %544
    %v547 = vmul.f32 %v530, %v545
    %v548 = vmul.f32 %v534, %v545
    %v549 = vmul.f32 %v538, %v545
    %v550 = vmul.f32 %v542, %v545
    %v551 = vadd.f32 %v523, %v547
    %v552 = vadd.f32 %v524, %v548
    %v553 = vadd.f32 %v525, %v549
    %v554 = vadd.f32 %v526, %v550
    %v555 = vlaneseq
    %v556 = vshrl.u32 %v555, 7
    %v557 = vsub.s32 5, %v556
    %v558 = vrot.slane %v395, %v557
    %v559 = vlaneseq
    %v560 = vshrl.u32 %v559, 7
    %v561 = vsub.s32 5, %v560
    %v562 = vrot.slane %v396, %v561
    %v563 = vlaneseq
    %v564 = vshrl.u32 %v563, 7
    %v565 = vsub.s32 5, %v564
    %v566 = vrot.slane %v397, %v565
    %v567 = vlaneseq
    %v568 = vshrl.u32 %v567, 7
    %v569 = vsub.s32 5, %v568
    %v570 = vrot.slane %v398, %v569
    %571 = vset.pattern.permute.xlu0 13
    %572 = vperm.xlu0 %571, %v43
    %v573 = vpop.permute.xlu0 %572
    %v575 = vmul.f32 %v558, %v573
    %v576 = vmul.f32 %v562, %v573
    %v577 = vmul.f32 %v566, %v573
    %v578 = vmul.f32 %v570, %v573
    %v579 = vadd.f32 %v551, %v575
    %v580 = vadd.f32 %v552, %v576
    %v581 = vadd.f32 %v553, %v577
    %v582 = vadd.f32 %v554, %v578
    %v583 = vlaneseq
    %v584 = vshrl.u32 %v583, 7
    %v585 = vsub.s32 6, %v584
    %v586 = vrot.slane %v395, %v585
    %v587 = vlaneseq
    %v588 = vshrl.u32 %v587, 7
    %v589 = vsub.s32 6, %v588
    %v590 = vrot.slane %v396, %v589
    %v591 = vlaneseq
    %v592 = vshrl.u32 %v591, 7
    %v593 = vsub.s32 6, %v592
    %v594 = vrot.slane %v397, %v593
    %v595 = vlaneseq
    %v596 = vshrl.u32 %v595, 7
    %v597 = vsub.s32 6, %v596
    %v598 = vrot.slane %v398, %v597
    %599 = vset.pattern.permute.xlu0 14
    %600 = vperm.xlu0 %599, %v43
    %v601 = vpop.permute.xlu0 %600
    %v603 = vmul.f32 %v586, %v601
    %v604 = vmul.f32 %v590, %v601
    %v605 = vmul.f32 %v594, %v601
    %v606 = vmul.f32 %v598, %v601
    %v607 = vadd.f32 %v579, %v603
    %v608 = vadd.f32 %v580, %v604
    %v609 = vadd.f32 %v581, %v605
    %v610 = vadd.f32 %v582, %v606
    %v611 = vlaneseq
    %v612 = vshrl.u32 %v611, 7
    %v613 = vsub.s32 7, %v612
    %v614 = vrot.slane %v395, %v613
    %v615 = vlaneseq
    %v616 = vshrl.u32 %v615, 7
    %v617 = vsub.s32 7, %v616
    %v618 = vrot.slane %v396, %v617
    %v619 = vlaneseq
    %v620 = vshrl.u32 %v619, 7
    %v621 = vsub.s32 7, %v620
    %v622 = vrot.slane %v397, %v621
    %v623 = vlaneseq
    %v624 = vshrl.u32 %v623, 7
    %v625 = vsub.s32 7, %v624
    %v626 = vrot.slane %v398, %v625
    %627 = vset.pattern.permute.xlu0 15
    %628 = vperm.xlu0 %627, %v43
    %v629 = vpop.permute.xlu0 %628
    %v631 = vmul.f32 %v614, %v629
    %v632 = vmul.f32 %v618, %v629
    %v633 = vmul.f32 %v622, %v629
    %v634 = vmul.f32 %v626, %v629
    %v635 = vadd.f32 %v607, %v631
    %v636 = vadd.f32 %v608, %v632
    %v637 = vadd.f32 %v609, %v633
    %v638 = vadd.f32 %v610, %v634
    %v639 = vlaneseq
    %v640 = vshrl.u32 %v639, 7
    %v641 = vsub.s32 0, %v640
    %v642 = vrot.slane %v399, %v641
    %v643 = vlaneseq
    %v644 = vshrl.u32 %v643, 7
    %v645 = vsub.s32 0, %v644
    %v646 = vrot.slane %v400, %v645
    %v647 = vlaneseq
    %v648 = vshrl.u32 %v647, 7
    %v649 = vsub.s32 0, %v648
    %v650 = vrot.slane %v401, %v649
    %v651 = vlaneseq
    %v652 = vshrl.u32 %v651, 7
    %v653 = vsub.s32 0, %v652
    %v654 = vrot.slane %v402, %v653
    %655 = vset.pattern.permute.xlu0 16
    %656 = vperm.xlu0 %655, %v43
    %v657 = vpop.permute.xlu0 %656
    %v659 = vmul.f32 %v642, %v657
    %v660 = vmul.f32 %v646, %v657
    %v661 = vmul.f32 %v650, %v657
    %v662 = vmul.f32 %v654, %v657
    %v663 = vadd.f32 %v635, %v659
    %v664 = vadd.f32 %v636, %v660
    %v665 = vadd.f32 %v637, %v661
    %v666 = vadd.f32 %v638, %v662
    %v667 = vlaneseq
    %v668 = vshrl.u32 %v667, 7
    %v669 = vsub.s32 1, %v668
    %v670 = vrot.slane %v399, %v669
    %v671 = vlaneseq
    %v672 = vshrl.u32 %v671, 7
    %v673 = vsub.s32 1, %v672
    %v674 = vrot.slane %v400, %v673
    %v675 = vlaneseq
    %v676 = vshrl.u32 %v675, 7
    %v677 = vsub.s32 1, %v676
    %v678 = vrot.slane %v401, %v677
    %v679 = vlaneseq
    %v680 = vshrl.u32 %v679, 7
    %v681 = vsub.s32 1, %v680
    %v682 = vrot.slane %v402, %v681
    %683 = vset.pattern.permute.xlu0 17
    %684 = vperm.xlu0 %683, %v43
    %v685 = vpop.permute.xlu0 %684
    %v687 = vmul.f32 %v670, %v685
    %v688 = vmul.f32 %v674, %v685
    %v689 = vmul.f32 %v678, %v685
    %v690 = vmul.f32 %v682, %v685
    %v691 = vadd.f32 %v663, %v687
    %v692 = vadd.f32 %v664, %v688
    %v693 = vadd.f32 %v665, %v689
    %v694 = vadd.f32 %v666, %v690
    %v695 = vlaneseq
    %v696 = vshrl.u32 %v695, 7
    %v697 = vsub.s32 2, %v696
    %v698 = vrot.slane %v399, %v697
    %v699 = vlaneseq
    %v700 = vshrl.u32 %v699, 7
    %v701 = vsub.s32 2, %v700
    %v702 = vrot.slane %v400, %v701
    %v703 = vlaneseq
    %v704 = vshrl.u32 %v703, 7
    %v705 = vsub.s32 2, %v704
    %v706 = vrot.slane %v401, %v705
    %v707 = vlaneseq
    %v708 = vshrl.u32 %v707, 7
    %v709 = vsub.s32 2, %v708
    %v710 = vrot.slane %v402, %v709
    %711 = vset.pattern.permute.xlu0 18
    %712 = vperm.xlu0 %711, %v43
    %v713 = vpop.permute.xlu0 %712
    %v715 = vmul.f32 %v698, %v713
    %v716 = vmul.f32 %v702, %v713
    %v717 = vmul.f32 %v706, %v713
    %v718 = vmul.f32 %v710, %v713
    %v719 = vadd.f32 %v691, %v715
    %v720 = vadd.f32 %v692, %v716
    %v721 = vadd.f32 %v693, %v717
    %v722 = vadd.f32 %v694, %v718
    %v723 = vlaneseq
    %v724 = vshrl.u32 %v723, 7
    %v725 = vsub.s32 3, %v724
    %v726 = vrot.slane %v399, %v725
    %v727 = vlaneseq
    %v728 = vshrl.u32 %v727, 7
    %v729 = vsub.s32 3, %v728
    %v730 = vrot.slane %v400, %v729
    %v731 = vlaneseq
    %v732 = vshrl.u32 %v731, 7
    %v733 = vsub.s32 3, %v732
    %v734 = vrot.slane %v401, %v733
    %v735 = vlaneseq
    %v736 = vshrl.u32 %v735, 7
    %v737 = vsub.s32 3, %v736
    %v738 = vrot.slane %v402, %v737
    %739 = vset.pattern.permute.xlu0 19
    %740 = vperm.xlu0 %739, %v43
    %v741 = vpop.permute.xlu0 %740
    %v743 = vmul.f32 %v726, %v741
    %v744 = vmul.f32 %v730, %v741
    %v745 = vmul.f32 %v734, %v741
    %v746 = vmul.f32 %v738, %v741
    %v747 = vadd.f32 %v719, %v743
    %v748 = vadd.f32 %v720, %v744
    %v749 = vadd.f32 %v721, %v745
    %v750 = vadd.f32 %v722, %v746
    %v751 = vlaneseq
    %v752 = vshrl.u32 %v751, 7
    %v753 = vsub.s32 4, %v752
    %v754 = vrot.slane %v399, %v753
    %v755 = vlaneseq
    %v756 = vshrl.u32 %v755, 7
    %v757 = vsub.s32 4, %v756
    %v758 = vrot.slane %v400, %v757
    %v759 = vlaneseq
    %v760 = vshrl.u32 %v759, 7
    %v761 = vsub.s32 4, %v760
    %v762 = vrot.slane %v401, %v761
    %v763 = vlaneseq
    %v764 = vshrl.u32 %v763, 7
    %v765 = vsub.s32 4, %v764
    %v766 = vrot.slane %v402, %v765
    %767 = vset.pattern.permute.xlu0 20
    %768 = vperm.xlu0 %767, %v43
    %v769 = vpop.permute.xlu0 %768
    %v771 = vmul.f32 %v754, %v769
    %v772 = vmul.f32 %v758, %v769
    %v773 = vmul.f32 %v762, %v769
    %v774 = vmul.f32 %v766, %v769
    %v775 = vadd.f32 %v747, %v771
    %v776 = vadd.f32 %v748, %v772
    %v777 = vadd.f32 %v749, %v773
    %v778 = vadd.f32 %v750, %v774
    %v779 = vlaneseq
    %v780 = vshrl.u32 %v779, 7
    %v781 = vsub.s32 5, %v780
    %v782 = vrot.slane %v399, %v781
    %v783 = vlaneseq
    %v784 = vshrl.u32 %v783, 7
    %v785 = vsub.s32 5, %v784
    %v786 = vrot.slane %v400, %v785
    %v787 = vlaneseq
    %v788 = vshrl.u32 %v787, 7
    %v789 = vsub.s32 5, %v788
    %v790 = vrot.slane %v401, %v789
    %v791 = vlaneseq
    %v792 = vshrl.u32 %v791, 7
    %v793 = vsub.s32 5, %v792
    %v794 = vrot.slane %v402, %v793
    %795 = vset.pattern.permute.xlu0 21
    %796 = vperm.xlu0 %795, %v43
    %v797 = vpop.permute.xlu0 %796
    %v799 = vmul.f32 %v782, %v797
    %v800 = vmul.f32 %v786, %v797
    %v801 = vmul.f32 %v790, %v797
    %v802 = vmul.f32 %v794, %v797
    %v803 = vadd.f32 %v775, %v799
    %v804 = vadd.f32 %v776, %v800
    %v805 = vadd.f32 %v777, %v801
    %v806 = vadd.f32 %v778, %v802
    %v807 = vlaneseq
    %v808 = vshrl.u32 %v807, 7
    %v809 = vsub.s32 6, %v808
    %v810 = vrot.slane %v399, %v809
    %v811 = vlaneseq
    %v812 = vshrl.u32 %v811, 7
    %v813 = vsub.s32 6, %v812
    %v814 = vrot.slane %v400, %v813
    %v815 = vlaneseq
    %v816 = vshrl.u32 %v815, 7
    %v817 = vsub.s32 6, %v816
    %v818 = vrot.slane %v401, %v817
    %v819 = vlaneseq
    %v820 = vshrl.u32 %v819, 7
    %v821 = vsub.s32 6, %v820
    %v822 = vrot.slane %v402, %v821
    %823 = vset.pattern.permute.xlu0 22
    %824 = vperm.xlu0 %823, %v43
    %v825 = vpop.permute.xlu0 %824
    %v827 = vmul.f32 %v810, %v825
    %v828 = vmul.f32 %v814, %v825
    %v829 = vmul.f32 %v818, %v825
    %v830 = vmul.f32 %v822, %v825
    %v831 = vadd.f32 %v803, %v827
    %v832 = vadd.f32 %v804, %v828
    %v833 = vadd.f32 %v805, %v829
    %v834 = vadd.f32 %v806, %v830
    %v835 = vlaneseq
    %v836 = vshrl.u32 %v835, 7
    %v837 = vsub.s32 7, %v836
    %v838 = vrot.slane %v399, %v837
    %v839 = vlaneseq
    %v840 = vshrl.u32 %v839, 7
    %v841 = vsub.s32 7, %v840
    %v842 = vrot.slane %v400, %v841
    %v843 = vlaneseq
    %v844 = vshrl.u32 %v843, 7
    %v845 = vsub.s32 7, %v844
    %v846 = vrot.slane %v401, %v845
    %v847 = vlaneseq
    %v848 = vshrl.u32 %v847, 7
    %v849 = vsub.s32 7, %v848
    %v850 = vrot.slane %v402, %v849
    %851 = vset.pattern.permute.xlu0 23
    %852 = vperm.xlu0 %851, %v43
    %v853 = vpop.permute.xlu0 %852
    %v855 = vmul.f32 %v838, %v853
    %v856 = vmul.f32 %v842, %v853
    %v857 = vmul.f32 %v846, %v853
    %v858 = vmul.f32 %v850, %v853
    %v859 = vadd.f32 %v831, %v855
    %v860 = vadd.f32 %v832, %v856
    %v861 = vadd.f32 %v833, %v857
    %v862 = vadd.f32 %v834, %v858
    %v863 = vlaneseq
    %v864 = vshrl.u32 %v863, 7
    %v865 = vsub.s32 0, %v864
    %v866 = vrot.slane %v403, %v865
    %v867 = vlaneseq
    %v868 = vshrl.u32 %v867, 7
    %v869 = vsub.s32 0, %v868
    %v870 = vrot.slane %v404, %v869
    %v871 = vlaneseq
    %v872 = vshrl.u32 %v871, 7
    %v873 = vsub.s32 0, %v872
    %v874 = vrot.slane %v405, %v873
    %v875 = vlaneseq
    %v876 = vshrl.u32 %v875, 7
    %v877 = vsub.s32 0, %v876
    %v878 = vrot.slane %v406, %v877
    %879 = vset.pattern.permute.xlu0 24
    %880 = vperm.xlu0 %879, %v43
    %v881 = vpop.permute.xlu0 %880
    %v883 = vmul.f32 %v866, %v881
    %v884 = vmul.f32 %v870, %v881
    %v885 = vmul.f32 %v874, %v881
    %v886 = vmul.f32 %v878, %v881
    %v887 = vadd.f32 %v859, %v883
    %v888 = vadd.f32 %v860, %v884
    %v889 = vadd.f32 %v861, %v885
    %v890 = vadd.f32 %v862, %v886
    %v891 = vlaneseq
    %v892 = vshrl.u32 %v891, 7
    %v893 = vsub.s32 1, %v892
    %v894 = vrot.slane %v403, %v893
    %v895 = vlaneseq
    %v896 = vshrl.u32 %v895, 7
    %v897 = vsub.s32 1, %v896
    %v898 = vrot.slane %v404, %v897
    %v899 = vlaneseq
    %v900 = vshrl.u32 %v899, 7
    %v901 = vsub.s32 1, %v900
    %v902 = vrot.slane %v405, %v901
    %v903 = vlaneseq
    %v904 = vshrl.u32 %v903, 7
    %v905 = vsub.s32 1, %v904
    %v906 = vrot.slane %v406, %v905
    %907 = vset.pattern.permute.xlu0 25
    %908 = vperm.xlu0 %907, %v43
    %v909 = vpop.permute.xlu0 %908
    %v911 = vmul.f32 %v894, %v909
    %v912 = vmul.f32 %v898, %v909
    %v913 = vmul.f32 %v902, %v909
    %v914 = vmul.f32 %v906, %v909
    %v915 = vadd.f32 %v887, %v911
    %v916 = vadd.f32 %v888, %v912
    %v917 = vadd.f32 %v889, %v913
    %v918 = vadd.f32 %v890, %v914
    %v919 = vlaneseq
    %v920 = vshrl.u32 %v919, 7
    %v921 = vsub.s32 2, %v920
    %v922 = vrot.slane %v403, %v921
    %v923 = vlaneseq
    %v924 = vshrl.u32 %v923, 7
    %v925 = vsub.s32 2, %v924
    %v926 = vrot.slane %v404, %v925
    %v927 = vlaneseq
    %v928 = vshrl.u32 %v927, 7
    %v929 = vsub.s32 2, %v928
    %v930 = vrot.slane %v405, %v929
    %v931 = vlaneseq
    %v932 = vshrl.u32 %v931, 7
    %v933 = vsub.s32 2, %v932
    %v934 = vrot.slane %v406, %v933
    %935 = vset.pattern.permute.xlu0 26
    %936 = vperm.xlu0 %935, %v43
    %v937 = vpop.permute.xlu0 %936
    %v939 = vmul.f32 %v922, %v937
    %v940 = vmul.f32 %v926, %v937
    %v941 = vmul.f32 %v930, %v937
    %v942 = vmul.f32 %v934, %v937
    %v943 = vadd.f32 %v915, %v939
    %v944 = vadd.f32 %v916, %v940
    %v945 = vadd.f32 %v917, %v941
    %v946 = vadd.f32 %v918, %v942
    %v947 = vlaneseq
    %v948 = vshrl.u32 %v947, 7
    %v949 = vsub.s32 3, %v948
    %v950 = vrot.slane %v403, %v949
    %v951 = vlaneseq
    %v952 = vshrl.u32 %v951, 7
    %v953 = vsub.s32 3, %v952
    %v954 = vrot.slane %v404, %v953
    %v955 = vlaneseq
    %v956 = vshrl.u32 %v955, 7
    %v957 = vsub.s32 3, %v956
    %v958 = vrot.slane %v405, %v957
    %v959 = vlaneseq
    %v960 = vshrl.u32 %v959, 7
    %v961 = vsub.s32 3, %v960
    %v962 = vrot.slane %v406, %v961
    %963 = vset.pattern.permute.xlu0 27
    %964 = vperm.xlu0 %963, %v43
    %v965 = vpop.permute.xlu0 %964
    %v967 = vmul.f32 %v950, %v965
    %v968 = vmul.f32 %v954, %v965
    %v969 = vmul.f32 %v958, %v965
    %v970 = vmul.f32 %v962, %v965
    %v971 = vadd.f32 %v943, %v967
    %v972 = vadd.f32 %v944, %v968
    %v973 = vadd.f32 %v945, %v969
    %v974 = vadd.f32 %v946, %v970
    %v975 = vlaneseq
    %v976 = vshrl.u32 %v975, 7
    %v977 = vsub.s32 4, %v976
    %v978 = vrot.slane %v403, %v977
    %v979 = vlaneseq
    %v980 = vshrl.u32 %v979, 7
    %v981 = vsub.s32 4, %v980
    %v982 = vrot.slane %v404, %v981
    %v983 = vlaneseq
    %v984 = vshrl.u32 %v983, 7
    %v985 = vsub.s32 4, %v984
    %v986 = vrot.slane %v405, %v985
    %v987 = vlaneseq
    %v988 = vshrl.u32 %v987, 7
    %v989 = vsub.s32 4, %v988
    %v990 = vrot.slane %v406, %v989
    %991 = vset.pattern.permute.xlu0 28
    %992 = vperm.xlu0 %991, %v43
    %v993 = vpop.permute.xlu0 %992
    %v995 = vmul.f32 %v978, %v993
    %v996 = vmul.f32 %v982, %v993
    %v997 = vmul.f32 %v986, %v993
    %v998 = vmul.f32 %v990, %v993
    %v999 = vadd.f32 %v971, %v995
    %v1000 = vadd.f32 %v972, %v996
    %v1001 = vadd.f32 %v973, %v997
    %v1002 = vadd.f32 %v974, %v998
    %v1003 = vlaneseq
    %v1004 = vshrl.u32 %v1003, 7
    %v1005 = vsub.s32 5, %v1004
    %v1006 = vrot.slane %v403, %v1005
    %v1007 = vlaneseq
    %v1008 = vshrl.u32 %v1007, 7
    %v1009 = vsub.s32 5, %v1008
    %v1010 = vrot.slane %v404, %v1009
    %v1011 = vlaneseq
    %v1012 = vshrl.u32 %v1011, 7
    %v1013 = vsub.s32 5, %v1012
    %v1014 = vrot.slane %v405, %v1013
    %v1015 = vlaneseq
    %v1016 = vshrl.u32 %v1015, 7
    %v1017 = vsub.s32 5, %v1016
    %v1018 = vrot.slane %v406, %v1017
    %1019 = vset.pattern.permute.xlu0 29
    %1020 = vperm.xlu0 %1019, %v43
    %v1021 = vpop.permute.xlu0 %1020
    %v1023 = vmul.f32 %v1006, %v1021
    %v1024 = vmul.f32 %v1010, %v1021
    %v1025 = vmul.f32 %v1014, %v1021
    %v1026 = vmul.f32 %v1018, %v1021
    %v1027 = vadd.f32 %v999, %v1023
    %v1028 = vadd.f32 %v1000, %v1024
    %v1029 = vadd.f32 %v1001, %v1025
    %v1030 = vadd.f32 %v1002, %v1026
    %v1031 = vlaneseq
    %v1032 = vshrl.u32 %v1031, 7
    %v1033 = vsub.s32 6, %v1032
    %v1034 = vrot.slane %v403, %v1033
    %v1035 = vlaneseq
    %v1036 = vshrl.u32 %v1035, 7
    %v1037 = vsub.s32 6, %v1036
    %v1038 = vrot.slane %v404, %v1037
    %v1039 = vlaneseq
    %v1040 = vshrl.u32 %v1039, 7
    %v1041 = vsub.s32 6, %v1040
    %v1042 = vrot.slane %v405, %v1041
    %v1043 = vlaneseq
    %v1044 = vshrl.u32 %v1043, 7
    %v1045 = vsub.s32 6, %v1044
    %v1046 = vrot.slane %v406, %v1045
    %1047 = vset.pattern.permute.xlu0 30
    %1048 = vperm.xlu0 %1047, %v43
    %v1049 = vpop.permute.xlu0 %1048
    %v1051 = vmul.f32 %v1034, %v1049
    %v1052 = vmul.f32 %v1038, %v1049
    %v1053 = vmul.f32 %v1042, %v1049
    %v1054 = vmul.f32 %v1046, %v1049
    %v1055 = vadd.f32 %v1027, %v1051
    %v1056 = vadd.f32 %v1028, %v1052
    %v1057 = vadd.f32 %v1029, %v1053
    %v1058 = vadd.f32 %v1030, %v1054
    %v1059 = vlaneseq
    %v1060 = vshrl.u32 %v1059, 7
    %v1061 = vsub.s32 7, %v1060
    %v1062 = vrot.slane %v403, %v1061
    %v1063 = vlaneseq
    %v1064 = vshrl.u32 %v1063, 7
    %v1065 = vsub.s32 7, %v1064
    %v1066 = vrot.slane %v404, %v1065
    %v1067 = vlaneseq
    %v1068 = vshrl.u32 %v1067, 7
    %v1069 = vsub.s32 7, %v1068
    %v1070 = vrot.slane %v405, %v1069
    %v1071 = vlaneseq
    %v1072 = vshrl.u32 %v1071, 7
    %v1073 = vsub.s32 7, %v1072
    %v1074 = vrot.slane %v406, %v1073
    %1075 = vset.pattern.permute.xlu0 31
    %1076 = vperm.xlu0 %1075, %v43
    %v1077 = vpop.permute.xlu0 %1076
    %v1079 = vmul.f32 %v1062, %v1077
    %v1080 = vmul.f32 %v1066, %v1077
    %v1081 = vmul.f32 %v1070, %v1077
    %v1082 = vmul.f32 %v1074, %v1077
    %v1083 = vadd.f32 %v1055, %v1079
    %v1084 = vadd.f32 %v1056, %v1080
    %v1085 = vadd.f32 %v1057, %v1081
    %v1086 = vadd.f32 %v1058, %v1082
    %v1087 = vlaneseq
    %v1088 = vshrl.u32 %v1087, 7
    %v1089 = vsub.s32 0, %v1088
    %v1090 = vrot.slane %v407, %v1089
    %v1091 = vlaneseq
    %v1092 = vshrl.u32 %v1091, 7
    %v1093 = vsub.s32 0, %v1092
    %v1094 = vrot.slane %v408, %v1093
    %v1095 = vlaneseq
    %v1096 = vshrl.u32 %v1095, 7
    %v1097 = vsub.s32 0, %v1096
    %v1098 = vrot.slane %v409, %v1097
    %v1099 = vlaneseq
    %v1100 = vshrl.u32 %v1099, 7
    %v1101 = vsub.s32 0, %v1100
    %v1102 = vrot.slane %v410, %v1101
    %1103 = vset.pattern.permute.xlu0 32
    %1104 = vperm.xlu0 %1103, %v43
    %v1105 = vpop.permute.xlu0 %1104
    %v1107 = vmul.f32 %v1090, %v1105
    %v1108 = vmul.f32 %v1094, %v1105
    %v1109 = vmul.f32 %v1098, %v1105
    %v1110 = vmul.f32 %v1102, %v1105
    %v1111 = vadd.f32 %v1083, %v1107
    %v1112 = vadd.f32 %v1084, %v1108
    %v1113 = vadd.f32 %v1085, %v1109
    %v1114 = vadd.f32 %v1086, %v1110
    %v1115 = vlaneseq
    %v1116 = vshrl.u32 %v1115, 7
    %v1117 = vsub.s32 1, %v1116
    %v1118 = vrot.slane %v407, %v1117
    %v1119 = vlaneseq
    %v1120 = vshrl.u32 %v1119, 7
    %v1121 = vsub.s32 1, %v1120
    %v1122 = vrot.slane %v408, %v1121
    %v1123 = vlaneseq
    %v1124 = vshrl.u32 %v1123, 7
    %v1125 = vsub.s32 1, %v1124
    %v1126 = vrot.slane %v409, %v1125
    %v1127 = vlaneseq
    %v1128 = vshrl.u32 %v1127, 7
    %v1129 = vsub.s32 1, %v1128
    %v1130 = vrot.slane %v410, %v1129
    %1131 = vset.pattern.permute.xlu0 33
    %1132 = vperm.xlu0 %1131, %v43
    %v1133 = vpop.permute.xlu0 %1132
    %v1135 = vmul.f32 %v1118, %v1133
    %v1136 = vmul.f32 %v1122, %v1133
    %v1137 = vmul.f32 %v1126, %v1133
    %v1138 = vmul.f32 %v1130, %v1133
    %v1139 = vadd.f32 %v1111, %v1135
    %v1140 = vadd.f32 %v1112, %v1136
    %v1141 = vadd.f32 %v1113, %v1137
    %v1142 = vadd.f32 %v1114, %v1138
    %v1143 = vlaneseq
    %v1144 = vshrl.u32 %v1143, 7
    %v1145 = vsub.s32 2, %v1144
    %v1146 = vrot.slane %v407, %v1145
    %v1147 = vlaneseq
    %v1148 = vshrl.u32 %v1147, 7
    %v1149 = vsub.s32 2, %v1148
    %v1150 = vrot.slane %v408, %v1149
    %v1151 = vlaneseq
    %v1152 = vshrl.u32 %v1151, 7
    %v1153 = vsub.s32 2, %v1152
    %v1154 = vrot.slane %v409, %v1153
    %v1155 = vlaneseq
    %v1156 = vshrl.u32 %v1155, 7
    %v1157 = vsub.s32 2, %v1156
    %v1158 = vrot.slane %v410, %v1157
    %1159 = vset.pattern.permute.xlu0 34
    %1160 = vperm.xlu0 %1159, %v43
    %v1161 = vpop.permute.xlu0 %1160
    %v1163 = vmul.f32 %v1146, %v1161
    %v1164 = vmul.f32 %v1150, %v1161
    %v1165 = vmul.f32 %v1154, %v1161
    %v1166 = vmul.f32 %v1158, %v1161
    %v1167 = vadd.f32 %v1139, %v1163
    %v1168 = vadd.f32 %v1140, %v1164
    %v1169 = vadd.f32 %v1141, %v1165
    %v1170 = vadd.f32 %v1142, %v1166
    %v1171 = vlaneseq
    %v1172 = vshrl.u32 %v1171, 7
    %v1173 = vsub.s32 3, %v1172
    %v1174 = vrot.slane %v407, %v1173
    %v1175 = vlaneseq
    %v1176 = vshrl.u32 %v1175, 7
    %v1177 = vsub.s32 3, %v1176
    %v1178 = vrot.slane %v408, %v1177
    %v1179 = vlaneseq
    %v1180 = vshrl.u32 %v1179, 7
    %v1181 = vsub.s32 3, %v1180
    %v1182 = vrot.slane %v409, %v1181
    %v1183 = vlaneseq
    %v1184 = vshrl.u32 %v1183, 7
    %v1185 = vsub.s32 3, %v1184
    %v1186 = vrot.slane %v410, %v1185
    %1187 = vset.pattern.permute.xlu0 35
    %1188 = vperm.xlu0 %1187, %v43
    %v1189 = vpop.permute.xlu0 %1188
    %v1191 = vmul.f32 %v1174, %v1189
    %v1192 = vmul.f32 %v1178, %v1189
    %v1193 = vmul.f32 %v1182, %v1189
    %v1194 = vmul.f32 %v1186, %v1189
    %v1195 = vadd.f32 %v1167, %v1191
    %v1196 = vadd.f32 %v1168, %v1192
    %v1197 = vadd.f32 %v1169, %v1193
    %v1198 = vadd.f32 %v1170, %v1194
    %v1199 = vlaneseq
    %v1200 = vshrl.u32 %v1199, 7
    %v1201 = vsub.s32 4, %v1200
    %v1202 = vrot.slane %v407, %v1201
    %v1203 = vlaneseq
    %v1204 = vshrl.u32 %v1203, 7
    %v1205 = vsub.s32 4, %v1204
    %v1206 = vrot.slane %v408, %v1205
    %v1207 = vlaneseq
    %v1208 = vshrl.u32 %v1207, 7
    %v1209 = vsub.s32 4, %v1208
    %v1210 = vrot.slane %v409, %v1209
    %v1211 = vlaneseq
    %v1212 = vshrl.u32 %v1211, 7
    %v1213 = vsub.s32 4, %v1212
    %v1214 = vrot.slane %v410, %v1213
    %1215 = vset.pattern.permute.xlu0 36
    %1216 = vperm.xlu0 %1215, %v43
    %v1217 = vpop.permute.xlu0 %1216
    %v1219 = vmul.f32 %v1202, %v1217
    %v1220 = vmul.f32 %v1206, %v1217
    %v1221 = vmul.f32 %v1210, %v1217
    %v1222 = vmul.f32 %v1214, %v1217
    %v1223 = vadd.f32 %v1195, %v1219
    %v1224 = vadd.f32 %v1196, %v1220
    %v1225 = vadd.f32 %v1197, %v1221
    %v1226 = vadd.f32 %v1198, %v1222
    %v1227 = vlaneseq
    %v1228 = vshrl.u32 %v1227, 7
    %v1229 = vsub.s32 5, %v1228
    %v1230 = vrot.slane %v407, %v1229
    %v1231 = vlaneseq
    %v1232 = vshrl.u32 %v1231, 7
    %v1233 = vsub.s32 5, %v1232
    %v1234 = vrot.slane %v408, %v1233
    %v1235 = vlaneseq
    %v1236 = vshrl.u32 %v1235, 7
    %v1237 = vsub.s32 5, %v1236
    %v1238 = vrot.slane %v409, %v1237
    %v1239 = vlaneseq
    %v1240 = vshrl.u32 %v1239, 7
    %v1241 = vsub.s32 5, %v1240
    %v1242 = vrot.slane %v410, %v1241
    %1243 = vset.pattern.permute.xlu0 37
    %1244 = vperm.xlu0 %1243, %v43
    %v1245 = vpop.permute.xlu0 %1244
    %v1247 = vmul.f32 %v1230, %v1245
    %v1248 = vmul.f32 %v1234, %v1245
    %v1249 = vmul.f32 %v1238, %v1245
    %v1250 = vmul.f32 %v1242, %v1245
    %v1251 = vadd.f32 %v1223, %v1247
    %v1252 = vadd.f32 %v1224, %v1248
    %v1253 = vadd.f32 %v1225, %v1249
    %v1254 = vadd.f32 %v1226, %v1250
    %v1255 = vlaneseq
    %v1256 = vshrl.u32 %v1255, 7
    %v1257 = vsub.s32 6, %v1256
    %v1258 = vrot.slane %v407, %v1257
    %v1259 = vlaneseq
    %v1260 = vshrl.u32 %v1259, 7
    %v1261 = vsub.s32 6, %v1260
    %v1262 = vrot.slane %v408, %v1261
    %v1263 = vlaneseq
    %v1264 = vshrl.u32 %v1263, 7
    %v1265 = vsub.s32 6, %v1264
    %v1266 = vrot.slane %v409, %v1265
    %v1267 = vlaneseq
    %v1268 = vshrl.u32 %v1267, 7
    %v1269 = vsub.s32 6, %v1268
    %v1270 = vrot.slane %v410, %v1269
    %1271 = vset.pattern.permute.xlu0 38
    %1272 = vperm.xlu0 %1271, %v43
    %v1273 = vpop.permute.xlu0 %1272
    %v1275 = vmul.f32 %v1258, %v1273
    %v1276 = vmul.f32 %v1262, %v1273
    %v1277 = vmul.f32 %v1266, %v1273
    %v1278 = vmul.f32 %v1270, %v1273
    %v1279 = vadd.f32 %v1251, %v1275
    %v1280 = vadd.f32 %v1252, %v1276
    %v1281 = vadd.f32 %v1253, %v1277
    %v1282 = vadd.f32 %v1254, %v1278
    %v1283 = vlaneseq
    %v1284 = vshrl.u32 %v1283, 7
    %v1285 = vsub.s32 7, %v1284
    %v1286 = vrot.slane %v407, %v1285
    %v1287 = vlaneseq
    %v1288 = vshrl.u32 %v1287, 7
    %v1289 = vsub.s32 7, %v1288
    %v1290 = vrot.slane %v408, %v1289
    %v1291 = vlaneseq
    %v1292 = vshrl.u32 %v1291, 7
    %v1293 = vsub.s32 7, %v1292
    %v1294 = vrot.slane %v409, %v1293
    %v1295 = vlaneseq
    %v1296 = vshrl.u32 %v1295, 7
    %v1297 = vsub.s32 7, %v1296
    %v1298 = vrot.slane %v410, %v1297
    %1299 = vset.pattern.permute.xlu0 39
    %1300 = vperm.xlu0 %1299, %v43
    %v1301 = vpop.permute.xlu0 %1300
    %v1303 = vmul.f32 %v1286, %v1301
    %v1304 = vmul.f32 %v1290, %v1301
    %v1305 = vmul.f32 %v1294, %v1301
    %v1306 = vmul.f32 %v1298, %v1301
    %v1307 = vadd.f32 %v1279, %v1303
    %v1308 = vadd.f32 %v1280, %v1304
    %v1309 = vadd.f32 %v1281, %v1305
    %v1310 = vadd.f32 %v1282, %v1306
    %v1311 = vmul.f32 %v1307, 1.442695
    %v1312 = vpow.pop %v1311
    %v1313 = vmul.f32 %v1308, 1.442695
    %v1314 = vpow.pop %v1313
    %v1315 = vmul.f32 %v1309, 1.442695
    %v1316 = vpow.pop %v1315
    %v1317 = vmul.f32 %v1310, 1.442695
    %v1318 = vpow.pop %v1317
    %v1323 = vrot.slane %v1312, 6
    %v1324 = vrot.slane %v1314, 6
    %v1325 = vrot.slane %v1316, 6
    %v1326 = vrot.slane %v1318, 6
    %v1331 = vmul.f32 %v239, %v1323
    %v1332 = vmul.f32 %v240, %v1324
    %v1333 = vmul.f32 %v241, %v1325
    %v1334 = vmul.f32 %v242, %v1326
    %v1335 = vadd.f32 %v1331, %v1307
    %v1336 = vadd.f32 %v1332, %v1308
    %v1337 = vadd.f32 %v1333, %v1309
    %v1338 = vadd.f32 %v1334, %v1310
    %v1343 = vcombine.low %v239, %v240
    %v1344 = vcombine.low %v241, %v242
    %1347 = vst [vmem:[#allocation7] sm:$0x33] %v1343
    %1348 = vst [vmem:[#allocation7 + $0x8] sm:$0x33] %v1344
    %v1353 = vcombine.low %v1335, %v1336
    %v1354 = vcombine.low %v1337, %v1338
    %1357 = vst [vmem:[#allocation7] sm:$0xcc] %v1353
    %1358 = vst [vmem:[#allocation7 + $0x8] sm:$0xcc] %v1354
    %vm1359 = vcmask 1041408
    %v1360 = vsel %vm1359, %v1307, 0.0
    %v1361 = vsel %vm1359, %v1308, 0.0
    %v1362 = vadd.f32 %v1360, %v1361
    %1363 = vadd.xlane.f32.xlu0 %v1362
    %v1364 = vpop.xlane.xlu0 %1363
    %v1365 = vsel %vm1359, %v1364, 0.0
    %v1366 = vrot.slane %v1365, 4
    %v1367 = vadd.f32 %v1365, %v1366
    %v1368 = vrot.slane %v1367, 2
    %v1369 = vadd.f32 %v1367, %v1368
    %v1370 = vrot.slane %v1369, 1
    %v1371 = vadd.f32 %v1369, %v1370
    %v1372 = vsel %vm1359, %v1309, 0.0
    %v1373 = vsel %vm1359, %v1310, 0.0
    %v1374 = vadd.f32 %v1372, %v1373
    %1375 = vadd.xlane.f32.xlu0 %v1374
    %v1376 = vpop.xlane.xlu0 %1375
    %v1377 = vsel %vm1359, %v1376, 0.0
    %v1378 = vrot.slane %v1377, 4
    %v1379 = vadd.f32 %v1377, %v1378
    %v1380 = vrot.slane %v1379, 2
    %v1381 = vadd.f32 %v1379, %v1380
    %v1382 = vrot.slane %v1381, 1
    %v1383 = vadd.f32 %v1381, %v1382
    %vm1384 = vcmask 7168
    %v1385 = vsel %vm1384, %v1371, %v1383
    %vm1386 = vcmask 8192
    %1387 = vst.msk [vmem:[#allocation8] sm:$0x1] %vm1386, %v1385
    // Predicated region
    $region18: #{tpu_custom_call.1} parent=1 // pred_check
      _
    $region19: #{tpu_custom_call.1} parent=1 // pred_check_branch
      %1389 = sbr.rel (0) target = $region21
    $region20: #{tpu_custom_call.1} parent=1 // pred_region
      %s1391 = ssub.s32 256, 256
      %1392 = vsyncadd [#allocation4], %s1391
      %s1394 = sshll.u32 [#allocation7], 4
      %s1395 = int_to_ptr.vmem [resolvable:$true] %s1394
      %1397 = dma.vmem_to_hbm [thread:$0]  %s1395, 256, %s2, [#allocation4]
    $region21: #{tpu_custom_call.1} parent=1 // pred_fallthru
      _
    // Predicated region
    $region22: #{tpu_custom_call.1} parent=1 // pred_check
      _
    $region23: #{tpu_custom_call.1} parent=1 // pred_check_branch
      %1399 = sbr.rel (0) target = $region25
    $region24: #{tpu_custom_call.1} parent=1 // pred_region
      %s1401 = ssub.s32 16, 16
      %1402 = vsyncadd [#allocation9], %s1401
      %s1404 = sshll.u32 [#allocation8], 4
      %s1405 = int_to_ptr.vmem [resolvable:$true] %s1404
      %1407 = dma.vmem_to_hbm [thread:$0]  %s1405, 16, %s3, [#allocation9]
    $region25: #{tpu_custom_call.1} parent=1 // pred_fallthru
      _
    // Predicated region
    $region26: #{tpu_custom_call.1} parent=1 // pred_check
      _
    $region27: #{tpu_custom_call.1} parent=1 // pred_check_branch
      %1409 = sbr.rel (0) target = $region29
    $region28: #{tpu_custom_call.1} parent=1 // pred_region
      %1410 = dma.done [#allocation4], 256
    $region29: #{tpu_custom_call.1} parent=1 // pred_fallthru
      _
    // Predicated region
    $region30: #{tpu_custom_call.1} parent=1 // pred_check
      _
    $region31: #{tpu_custom_call.1} parent=1 // pred_check_branch
      %1412 = sbr.rel (0) target = $region33
    $region32: #{tpu_custom_call.1} parent=1 // pred_region
      %1413 = dma.done [#allocation9], 16
    $region33: #{tpu_custom_call.1} parent=1 // pred_fallthru
      _
    %1414 = vsyncpa [#allocation3], 1
    %1415 = vsyncpa [#allocation6], 1
    %1416 = vsyncpa [#allocation4], 1
    %1417 = vsyncpa [#allocation9], 1

</llo_original>
